<compile_context>
chip_gen: v7x
topology: tpu7x:2x2x1
jax: 0.10.0
libtpu: 0.0.40
codegen_flags: <defaults>
</compile_context>

<pallas_src>
import jax
import jax.numpy as jnp
import numpy as np
from jax.experimental import pallas as pl
from jax.experimental.pallas import tpu as pltpu


# ----------------------------------------------------------------------------- kernel
def lstm_policy_kernel(
    x_ref, h0_ref, c0_ref,
    w1_ref, b1_ref, w2_ref, b2_ref,
    wih_ref, whh_ref, bg_ref,
    w3_ref, b3_ref, w4_ref, b4_ref,
    y_ref, hN_ref, cN_ref,
    h_scr,
):
    SB = x_ref.shape[0]
    B, H = h0_ref.shape
    S = SB // B
    f32 = jnp.float32

    # ---- fc_in: Linear + ReLU + Linear + ReLU, batched over all S*B rows ----
    z = jnp.dot(x_ref[...], w1_ref[...], preferred_element_type=f32) + b1_ref[...]
    z = jnp.maximum(z, 0.0)
    z = jnp.dot(z, w2_ref[...], preferred_element_type=f32) + b2_ref[...]
    z = jnp.maximum(z, 0.0)                                        # (S*B, H)

    # ---- input-side gate projection, hoisted out of the recurrence ----
    # gx[t] = z_t @ W_ih + (b_ih + b_hh); one big MXU pass instead of S tiny ones.
    gx = jnp.dot(z, wih_ref[...], preferred_element_type=f32) + bg_ref[...]   # (S*B, 4H)

    # ---- recurrence: one small (B,H)@(H,4H) matmul per step ----
    whh = whh_ref[...]
    h = h0_ref[...]
    c = c0_ref[...]
    for t in range(S):                        # S is static & small -> fully unrolled
        gates = gx[t * B:(t + 1) * B, :] + jnp.dot(
            h, whh, preferred_element_type=f32)                    # (B, 4H)
        sig = jax.nn.sigmoid(gates)           # activations on the full gate vreg
        tnh = jnp.tanh(gates)
        i_g = sig[:, 0 * H:1 * H]
        f_g = sig[:, 1 * H:2 * H]
        g_g = tnh[:, 2 * H:3 * H]
        o_g = sig[:, 3 * H:4 * H]
        c = f_g * c + i_g * g_g
        h = o_g * jnp.tanh(c)
        h_scr[t * B:(t + 1) * B, :] = h       # stash h_t for the batched fc_out pass
    hN_ref[...] = h
    cN_ref[...] = c

    # ---- fc_out: ReLU -> Linear -> ReLU -> Linear -> LogSoftmax, batched ----
    a = jnp.maximum(h_scr[...], 0.0)
    a = jnp.dot(a, w3_ref[...], preferred_element_type=f32) + b3_ref[...]
    a = jnp.maximum(a, 0.0)
    logits = jnp.dot(a, w4_ref[...], preferred_element_type=f32) + b4_ref[...]
    m = jnp.max(logits, axis=-1, keepdims=True)
    lse = jnp.log(jnp.sum(jnp.exp(logits - m), axis=-1, keepdims=True)) + m
    y_ref[...] = logits - lse                                      # (S*B, Out), one store


# ----------------------------------------------------------------------------- wrapper
@jax.jit
def lstm_policy_forward(x, params, h0, c0):
    S, B, In = x.shape
    H = params["w1"].shape[1]
    Out = params["w4"].shape[1]

    # Row-major (S, B, In) -> (S*B, In) is a free metadata reshape in XLA.
    x2d = x.reshape(S * B, In)
    b_gates = params["b_ih"] + params["b_hh"]        # fold the two LSTM biases

    full = lambda shape: pl.BlockSpec(shape, lambda i: (0, 0))

    grid_spec = pltpu.PrefetchScalarGridSpec(
        num_scalar_prefetch=0,
        grid=(1,),                                   # single kernel invocation
        in_specs=[
            full((S * B, In)),                       # x (all timesteps at once)
            full((B, H)), full((B, H)),              # h0, c0
            full((In, H)), full((1, H)),             # w1, b1
            full((H, H)), full((1, H)),              # w2, b2
            full((H, 4 * H)), full((H, 4 * H)),      # w_ih, w_hh
            full((1, 4 * H)),                        # b_ih + b_hh (fused)
            full((H, H)), full((1, H)),              # w3, b3
            full((H, Out)), full((1, Out)),          # w4, b4
        ],
        out_specs=[
            full((S * B, Out)),                      # y (single lane-dense-ish store)
            full((B, H)),                            # h_N
            full((B, H)),                            # c_N
        ],
        scratch_shapes=[
            pltpu.VMEM((S * B, H), jnp.float32),     # per-timestep h buffer
        ],
    )

    y2d, hN, cN = pl.pallas_call(
        lstm_policy_kernel,
        grid_spec=grid_spec,
        out_shape=(
            jax.ShapeDtypeStruct((S * B, Out), jnp.float32),
            jax.ShapeDtypeStruct((B, H), jnp.float32),
            jax.ShapeDtypeStruct((B, H), jnp.float32),
        ),
        compiler_params=pltpu.CompilerParams(
            dimension_semantics=("arbitrary",),
        ),
    )(
        x2d, h0, c0,
        params["w1"], params["b1"], params["w2"], params["b2"],
        params["w_ih"], params["w_hh"], b_gates,
        params["w3"], params["b3"], params["w4"], params["b4"],
    )
    y = y2d.reshape(S, B, Out)
    # PyTorch nn.LSTM returns (h_n, c_n) shaped (num_layers=1, batch, hidden)
    return y, (hN[None], cN[None])


# ----------------------------------------------------------------------------- reference
def lstm_policy_reference(x, params, h0, c0):
    S, B, In = x.shape
    H = params["w1"].shape[1]
    xf = x.reshape(S * B, In)
    z = jnp.maximum(xf @ params["w1"] + params["b1"], 0.0)
    z = jnp.maximum(z @ params["w2"] + params["b2"], 0.0)
    z = z.reshape(S, B, H)

    def step(carry, x_t):
        h, c = carry
        gates = x_t @ params["w_ih"] + h @ params["w_hh"] + params["b_ih"] + params["b_hh"]
        i = jax.nn.sigmoid(gates[:, 0 * H:1 * H])
        f = jax.nn.sigmoid(gates[:, 1 * H:2 * H])
        g = jnp.tanh(gates[:, 2 * H:3 * H])
        o = jax.nn.sigmoid(gates[:, 3 * H:4 * H])
        c = f * c + i * g
        h = o * jnp.tanh(c)
        return (h, c), h

    (hN, cN), hs = jax.lax.scan(step, (h0[0], c0[0]), z)
    a = jnp.maximum(hs.reshape(S * B, H), 0.0)
    a = jnp.maximum(a @ params["w3"] + params["b3"], 0.0)
    logits = a @ params["w4"] + params["b4"]
    y = jax.nn.log_softmax(logits, axis=-1).reshape(S, B, -1)
    return y, (hN[None], cN[None])


# ----------------------------------------------------------------------------- init
def init_params(key, in_features, hidden_features, out_features):
    """Deterministic init mirroring the module's shapes:
    Linear weights orthogonal (stored transposed as (in, out)), biases zero;
    LSTM params uniform(-1/sqrt(H), 1/sqrt(H)) like PyTorch defaults."""
    ks = jax.random.split(key, 8)
    ortho = jax.nn.initializers.orthogonal()
    H = hidden_features
    bound = 1.0 / np.sqrt(H)
    u = lambda k, shape: jax.random.uniform(k, shape, jnp.float32, -bound, bound)
    return {
        "w1": ortho(ks[0], (in_features, H), jnp.float32),       # (In, H)
        "b1": jnp.zeros((1, H), jnp.float32),
        "w2": ortho(ks[1], (H, H), jnp.float32),                 # (H, H)
        "b2": jnp.zeros((1, H), jnp.float32),
        "w_ih": u(ks[2], (H, 4 * H)),                            # (H, 4H) gates [i,f,g,o]
        "w_hh": u(ks[3], (H, 4 * H)),
        "b_ih": u(ks[4], (1, 4 * H)),
        "b_hh": u(ks[5], (1, 4 * H)),
        "w3": ortho(ks[6], (H, H), jnp.float32),
        "b3": jnp.zeros((1, H), jnp.float32),
        "w4": ortho(ks[7], (H, out_features), jnp.float32),
        "b4": jnp.zeros((1, out_features), jnp.float32),
    }


# ----------------------------------------------------------------------------- main
if __name__ == "__main__":
    SEQ, BATCH = 8, 4
    IN_FEATURES, HIDDEN, OUT_FEATURES = 16, 32, 8

    key = jax.random.PRNGKey(0)
    k_x, k_p = jax.random.split(key)
    x = jax.random.normal(k_x, (SEQ, BATCH, IN_FEATURES), jnp.float32)
    params = init_params(k_p, IN_FEATURES, HIDDEN, OUT_FEATURES)

    # default hc=None -> zeros, same as PyTorch nn.LSTM
    h0 = jnp.zeros((BATCH, HIDDEN), jnp.float32)
    c0 = jnp.zeros((BATCH, HIDDEN), jnp.float32)

    y, (hN, cN) = lstm_policy_forward(x, params, h0, c0)
    jax.block_until_ready((y, hN, cN))

    y_ref, (hN_ref, cN_ref) = lstm_policy_reference(x, params, h0[None], c0[None])
    np.testing.assert_allclose(np.asarray(y), np.asarray(y_ref), rtol=1e-4, atol=1e-4)
    np.testing.assert_allclose(np.asarray(hN), np.asarray(hN_ref), rtol=1e-4, atol=1e-4)
    np.testing.assert_allclose(np.asarray(cN), np.asarray(cN_ref), rtol=1e-4, atol=1e-4)

    print("KERNEL_OK")
</pallas_src>

<mosaic_0001>
module attributes {stable_mosaic.version = 11 : i64} {
  func.func @lstm_policy_kernel(%arg0: i32, %arg1: memref<32x16xf32, #tpu.memory_space<vmem>>, %arg2: memref<4x32xf32, #tpu.memory_space<vmem>>, %arg3: memref<4x32xf32, #tpu.memory_space<vmem>>, %arg4: memref<16x32xf32, #tpu.memory_space<vmem>>, %arg5: memref<1x32xf32, #tpu.memory_space<vmem>>, %arg6: memref<32x32xf32, #tpu.memory_space<vmem>>, %arg7: memref<1x32xf32, #tpu.memory_space<vmem>>, %arg8: memref<32x128xf32, #tpu.memory_space<vmem>>, %arg9: memref<32x128xf32, #tpu.memory_space<vmem>>, %arg10: memref<1x128xf32, #tpu.memory_space<vmem>>, %arg11: memref<32x32xf32, #tpu.memory_space<vmem>>, %arg12: memref<1x32xf32, #tpu.memory_space<vmem>>, %arg13: memref<32x8xf32, #tpu.memory_space<vmem>>, %arg14: memref<1x8xf32, #tpu.memory_space<vmem>>, %arg15: memref<32x8xf32, #tpu.memory_space<vmem>>, %arg16: memref<4x32xf32, #tpu.memory_space<vmem>>, %arg17: memref<4x32xf32, #tpu.memory_space<vmem>>, %arg18: memref<32x32xf32, #tpu.memory_space<vmem>>) attributes {dimension_semantics = [#tpu.dimension_semantics<arbitrary>], iteration_bounds = array<i64: 1>, scalar_prefetch = 0 : i64, scratch_operands = 1 : i64, tpu.core_type = #tpu.core_type<tc>, window_params = [{pipeline_mode = #tpu.pipeline_mode<synchronous>, transform_indices = @transform_0, window_bounds = array<i64: 32, 16>}, {pipeline_mode = #tpu.pipeline_mode<synchronous>, transform_indices = @transform_1, window_bounds = array<i64: 4, 32>}, {pipeline_mode = #tpu.pipeline_mode<synchronous>, transform_indices = @transform_2, window_bounds = array<i64: 4, 32>}, {pipeline_mode = #tpu.pipeline_mode<synchronous>, transform_indices = @transform_3, window_bounds = array<i64: 16, 32>}, {pipeline_mode = #tpu.pipeline_mode<synchronous>, transform_indices = @transform_4, window_bounds = array<i64: 1, 32>}, {pipeline_mode = #tpu.pipeline_mode<synchronous>, transform_indices = @transform_5, window_bounds = array<i64: 32, 32>}, {pipeline_mode = #tpu.pipeline_mode<synchronous>, transform_indices = @transform_6, window_bounds = array<i64: 1, 32>}, {pipeline_mode = #tpu.pipeline_mode<synchronous>, transform_indices = @transform_7, window_bounds = array<i64: 32, 128>}, {pipeline_mode = #tpu.pipeline_mode<synchronous>, transform_indices = @transform_8, window_bounds = array<i64: 32, 128>}, {pipeline_mode = #tpu.pipeline_mode<synchronous>, transform_indices = @transform_9, window_bounds = array<i64: 1, 128>}, {pipeline_mode = #tpu.pipeline_mode<synchronous>, transform_indices = @transform_10, window_bounds = array<i64: 32, 32>}, {pipeline_mode = #tpu.pipeline_mode<synchronous>, transform_indices = @transform_11, window_bounds = array<i64: 1, 32>}, {pipeline_mode = #tpu.pipeline_mode<synchronous>, transform_indices = @transform_12, window_bounds = array<i64: 32, 8>}, {pipeline_mode = #tpu.pipeline_mode<synchronous>, transform_indices = @transform_13, window_bounds = array<i64: 1, 8>}, {pipeline_mode = #tpu.pipeline_mode<synchronous>, transform_indices = @transform_14, window_bounds = array<i64: 32, 8>}, {pipeline_mode = #tpu.pipeline_mode<synchronous>, transform_indices = @transform_15, window_bounds = array<i64: 4, 32>}, {pipeline_mode = #tpu.pipeline_mode<synchronous>, transform_indices = @transform_16, window_bounds = array<i64: 4, 32>}]} {
    %c0 = arith.constant 0 : index
    %c0_0 = arith.constant 0 : index
    %0 = vector.load %arg1[%c0, %c0_0] : memref<32x16xf32, #tpu.memory_space<vmem>>, vector<32x16xf32>
    %c0_1 = arith.constant 0 : index
    %c0_2 = arith.constant 0 : index
    %1 = vector.load %arg4[%c0_1, %c0_2] : memref<16x32xf32, #tpu.memory_space<vmem>>, vector<16x32xf32>
    %cst = arith.constant dense<0.000000e+00> : vector<32x32xf32>
    %2 = tpu.matmul %0, %1, %cst {dimension_numbers = #tpu.dot_dimension_numbers<[1], [0], [0], [1], [0, 0, 1, 1], [], []>} : vector<32x16xf32>, vector<16x32xf32>, vector<32x32xf32> -> vector<32x32xf32>
    %c0_3 = arith.constant 0 : index
    %c0_4 = arith.constant 0 : index
    %3 = vector.load %arg5[%c0_3, %c0_4] : memref<1x32xf32, #tpu.memory_space<vmem>>, vector<1x32xf32>
    %4 = vector.broadcast %3 : vector<1x32xf32> to vector<32x32xf32>
    %5 = arith.addf %2, %4 : vector<32x32xf32>
    %cst_5 = arith.constant 0.000000e+00 : f32
    %6 = vector.broadcast %cst_5 : f32 to vector<32x32xf32>
    %7 = arith.maximumf %5, %6 : vector<32x32xf32>
    %c0_6 = arith.constant 0 : index
    %c0_7 = arith.constant 0 : index
    %8 = vector.load %arg6[%c0_6, %c0_7] : memref<32x32xf32, #tpu.memory_space<vmem>>, vector<32x32xf32>
    %cst_8 = arith.constant dense<0.000000e+00> : vector<32x32xf32>
    %9 = tpu.matmul %7, %8, %cst_8 {dimension_numbers = #tpu.dot_dimension_numbers<[1], [0], [0], [1], [0, 0, 1, 1], [], []>} : vector<32x32xf32>, vector<32x32xf32>, vector<32x32xf32> -> vector<32x32xf32>
    %c0_9 = arith.constant 0 : index
    %c0_10 = arith.constant 0 : index
    %10 = vector.load %arg7[%c0_9, %c0_10] : memref<1x32xf32, #tpu.memory_space<vmem>>, vector<1x32xf32>
    %11 = vector.broadcast %10 : vector<1x32xf32> to vector<32x32xf32>
    %12 = arith.addf %9, %11 : vector<32x32xf32>
    %cst_11 = arith.constant 0.000000e+00 : f32
    %13 = vector.broadcast %cst_11 : f32 to vector<32x32xf32>
    %14 = arith.maximumf %12, %13 : vector<32x32xf32>
    %c0_12 = arith.constant 0 : index
    %c0_13 = arith.constant 0 : index
    %15 = vector.load %arg8[%c0_12, %c0_13] : memref<32x128xf32, #tpu.memory_space<vmem>>, vector<32x128xf32>
    %cst_14 = arith.constant dense<0.000000e+00> : vector<32x128xf32>
    %16 = tpu.matmul %14, %15, %cst_14 {dimension_numbers = #tpu.dot_dimension_numbers<[1], [0], [0], [1], [0, 0, 1, 1], [], []>} : vector<32x32xf32>, vector<32x128xf32>, vector<32x128xf32> -> vector<32x128xf32>
    %c0_15 = arith.constant 0 : index
    %c0_16 = arith.constant 0 : index
    %17 = vector.load %arg10[%c0_15, %c0_16] : memref<1x128xf32, #tpu.memory_space<vmem>>, vector<1x128xf32>
    %18 = vector.broadcast %17 : vector<1x128xf32> to vector<32x128xf32>
    %19 = arith.addf %16, %18 : vector<32x128xf32>
    %c0_17 = arith.constant 0 : index
    %c0_18 = arith.constant 0 : index
    %20 = vector.load %arg9[%c0_17, %c0_18] : memref<32x128xf32, #tpu.memory_space<vmem>>, vector<32x128xf32>
    %c0_19 = arith.constant 0 : index
    %c0_20 = arith.constant 0 : index
    %21 = vector.load %arg2[%c0_19, %c0_20] : memref<4x32xf32, #tpu.memory_space<vmem>>, vector<4x32xf32>
    %c0_21 = arith.constant 0 : index
    %c0_22 = arith.constant 0 : index
    %22 = vector.load %arg3[%c0_21, %c0_22] : memref<4x32xf32, #tpu.memory_space<vmem>>, vector<4x32xf32>
    %23 = vector.extract_strided_slice %19 {offsets = [0, 0], sizes = [4, 128], strides = [1, 1]} : vector<32x128xf32> to vector<4x128xf32>
    %cst_23 = arith.constant dense<0.000000e+00> : vector<4x128xf32>
    %24 = tpu.matmul %21, %20, %cst_23 {dimension_numbers = #tpu.dot_dimension_numbers<[1], [0], [0], [1], [0, 0, 1, 1], [], []>} : vector<4x32xf32>, vector<32x128xf32>, vector<4x128xf32> -> vector<4x128xf32>
    %25 = arith.addf %23, %24 : vector<4x128xf32>
    %26 = arith.negf %25 : vector<4x128xf32>
    %27 = math.exp %26 : vector<4x128xf32>
    %cst_24 = arith.constant 1.000000e+00 : f32
    %28 = vector.broadcast %cst_24 : f32 to vector<4x128xf32>
    %29 = arith.addf %28, %27 : vector<4x128xf32>
    %30 = arith.divf %28, %29 : vector<4x128xf32>
    %31 = math.tanh %25 : vector<4x128xf32>
    %32 = vector.extract_strided_slice %30 {offsets = [0, 0], sizes = [4, 32], strides = [1, 1]} : vector<4x128xf32> to vector<4x32xf32>
    %33 = vector.extract_strided_slice %30 {offsets = [0, 32], sizes = [4, 32], strides = [1, 1]} : vector<4x128xf32> to vector<4x32xf32>
    %34 = vector.extract_strided_slice %31 {offsets = [0, 64], sizes = [4, 32], strides = [1, 1]} : vector<4x128xf32> to vector<4x32xf32>
    %35 = vector.extract_strided_slice %30 {offsets = [0, 96], sizes = [4, 32], strides = [1, 1]} : vector<4x128xf32> to vector<4x32xf32>
    %36 = arith.mulf %33, %22 : vector<4x32xf32>
    %37 = arith.mulf %32, %34 : vector<4x32xf32>
    %38 = arith.addf %36, %37 : vector<4x32xf32>
    %39 = math.tanh %38 : vector<4x32xf32>
    %40 = arith.mulf %35, %39 : vector<4x32xf32>
    %c0_25 = arith.constant 0 : index
    %c0_26 = arith.constant 0 : index
    %41 = vector.load %arg18[%c0_25, %c0_26] : memref<32x32xf32, #tpu.memory_space<vmem>>, vector<4x32xf32>
    tpu.vector_store %arg18[%c0_25, %c0_26], %40 {strides = array<i32>} : memref<32x32xf32, #tpu.memory_space<vmem>>, vector<4x32xf32>,
    %42 = vector.extract_strided_slice %19 {offsets = [4, 0], sizes = [4, 128], strides = [1, 1]} : vector<32x128xf32> to vector<4x128xf32>
    %cst_27 = arith.constant dense<0.000000e+00> : vector<4x128xf32>
    %43 = tpu.matmul %40, %20, %cst_27 {dimension_numbers = #tpu.dot_dimension_numbers<[1], [0], [0], [1], [0, 0, 1, 1], [], []>} : vector<4x32xf32>, vector<32x128xf32>, vector<4x128xf32> -> vector<4x128xf32>
    %44 = arith.addf %42, %43 : vector<4x128xf32>
    %45 = arith.negf %44 : vector<4x128xf32>
    %46 = math.exp %45 : vector<4x128xf32>
    %cst_28 = arith.constant 1.000000e+00 : f32
    %47 = vector.broadcast %cst_28 : f32 to vector<4x128xf32>
    %48 = arith.addf %47, %46 : vector<4x128xf32>
    %49 = arith.divf %47, %48 : vector<4x128xf32>
    %50 = math.tanh %44 : vector<4x128xf32>
    %51 = vector.extract_strided_slice %49 {offsets = [0, 0], sizes = [4, 32], strides = [1, 1]} : vector<4x128xf32> to vector<4x32xf32>
    %52 = vector.extract_strided_slice %49 {offsets = [0, 32], sizes = [4, 32], strides = [1, 1]} : vector<4x128xf32> to vector<4x32xf32>
    %53 = vector.extract_strided_slice %50 {offsets = [0, 64], sizes = [4, 32], strides = [1, 1]} : vector<4x128xf32> to vector<4x32xf32>
    %54 = vector.extract_strided_slice %49 {offsets = [0, 96], sizes = [4, 32], strides = [1, 1]} : vector<4x128xf32> to vector<4x32xf32>
    %55 = arith.mulf %52, %38 : vector<4x32xf32>
    %56 = arith.mulf %51, %53 : vector<4x32xf32>
    %57 = arith.addf %55, %56 : vector<4x32xf32>
    %58 = math.tanh %57 : vector<4x32xf32>
    %59 = arith.mulf %54, %58 : vector<4x32xf32>
    %c4 = arith.constant 4 : index
    %c0_29 = arith.constant 0 : index
    %60 = vector.load %arg18[%c4, %c0_29] : memref<32x32xf32, #tpu.memory_space<vmem>>, vector<4x32xf32>
    tpu.vector_store %arg18[%c4, %c0_29], %59 {strides = array<i32>} : memref<32x32xf32, #tpu.memory_space<vmem>>, vector<4x32xf32>,
    %61 = vector.extract_strided_slice %19 {offsets = [8, 0], sizes = [4, 128], strides = [1, 1]} : vector<32x128xf32> to vector<4x128xf32>
    %cst_30 = arith.constant dense<0.000000e+00> : vector<4x128xf32>
    %62 = tpu.matmul %59, %20, %cst_30 {dimension_numbers = #tpu.dot_dimension_numbers<[1], [0], [0], [1], [0, 0, 1, 1], [], []>} : vector<4x32xf32>, vector<32x128xf32>, vector<4x128xf32> -> vector<4x128xf32>
    %63 = arith.addf %61, %62 : vector<4x128xf32>
    %64 = arith.negf %63 : vector<4x128xf32>
    %65 = math.exp %64 : vector<4x128xf32>
    %cst_31 = arith.constant 1.000000e+00 : f32
    %66 = vector.broadcast %cst_31 : f32 to vector<4x128xf32>
    %67 = arith.addf %66, %65 : vector<4x128xf32>
    %68 = arith.divf %66, %67 : vector<4x128xf32>
    %69 = math.tanh %63 : vector<4x128xf32>
    %70 = vector.extract_strided_slice %68 {offsets = [0, 0], sizes = [4, 32], strides = [1, 1]} : vector<4x128xf32> to vector<4x32xf32>
    %71 = vector.extract_strided_slice %68 {offsets = [0, 32], sizes = [4, 32], strides = [1, 1]} : vector<4x128xf32> to vector<4x32xf32>
    %72 = vector.extract_strided_slice %69 {offsets = [0, 64], sizes = [4, 32], strides = [1, 1]} : vector<4x128xf32> to vector<4x32xf32>
    %73 = vector.extract_strided_slice %68 {offsets = [0, 96], sizes = [4, 32], strides = [1, 1]} : vector<4x128xf32> to vector<4x32xf32>
    %74 = arith.mulf %71, %57 : vector<4x32xf32>
    %75 = arith.mulf %70, %72 : vector<4x32xf32>
    %76 = arith.addf %74, %75 : vector<4x32xf32>
    %77 = math.tanh %76 : vector<4x32xf32>
    %78 = arith.mulf %73, %77 : vector<4x32xf32>
    %c8 = arith.constant 8 : index
    %c0_32 = arith.constant 0 : index
    %79 = vector.load %arg18[%c8, %c0_32] : memref<32x32xf32, #tpu.memory_space<vmem>>, vector<4x32xf32>
    tpu.vector_store %arg18[%c8, %c0_32], %78 {strides = array<i32>} : memref<32x32xf32, #tpu.memory_space<vmem>>, vector<4x32xf32>,
    %80 = vector.extract_strided_slice %19 {offsets = [12, 0], sizes = [4, 128], strides = [1, 1]} : vector<32x128xf32> to vector<4x128xf32>
    %cst_33 = arith.constant dense<0.000000e+00> : vector<4x128xf32>
    %81 = tpu.matmul %78, %20, %cst_33 {dimension_numbers = #tpu.dot_dimension_numbers<[1], [0], [0], [1], [0, 0, 1, 1], [], []>} : vector<4x32xf32>, vector<32x128xf32>, vector<4x128xf32> -> vector<4x128xf32>
    %82 = arith.addf %80, %81 : vector<4x128xf32>
    %83 = arith.negf %82 : vector<4x128xf32>
    %84 = math.exp %83 : vector<4x128xf32>
    %cst_34 = arith.constant 1.000000e+00 : f32
    %85 = vector.broadcast %cst_34 : f32 to vector<4x128xf32>
    %86 = arith.addf %85, %84 : vector<4x128xf32>
    %87 = arith.divf %85, %86 : vector<4x128xf32>
    %88 = math.tanh %82 : vector<4x128xf32>
    %89 = vector.extract_strided_slice %87 {offsets = [0, 0], sizes = [4, 32], strides = [1, 1]} : vector<4x128xf32> to vector<4x32xf32>
    %90 = vector.extract_strided_slice %87 {offsets = [0, 32], sizes = [4, 32], strides = [1, 1]} : vector<4x128xf32> to vector<4x32xf32>
    %91 = vector.extract_strided_slice %88 {offsets = [0, 64], sizes = [4, 32], strides = [1, 1]} : vector<4x128xf32> to vector<4x32xf32>
    %92 = vector.extract_strided_slice %87 {offsets = [0, 96], sizes = [4, 32], strides = [1, 1]} : vector<4x128xf32> to vector<4x32xf32>
    %93 = arith.mulf %90, %76 : vector<4x32xf32>
    %94 = arith.mulf %89, %91 : vector<4x32xf32>
    %95 = arith.addf %93, %94 : vector<4x32xf32>
    %96 = math.tanh %95 : vector<4x32xf32>
    %97 = arith.mulf %92, %96 : vector<4x32xf32>
    %c12 = arith.constant 12 : index
    %c0_35 = arith.constant 0 : index
    %98 = vector.load %arg18[%c12, %c0_35] : memref<32x32xf32, #tpu.memory_space<vmem>>, vector<4x32xf32>
    tpu.vector_store %arg18[%c12, %c0_35], %97 {strides = array<i32>} : memref<32x32xf32, #tpu.memory_space<vmem>>, vector<4x32xf32>,
    %99 = vector.extract_strided_slice %19 {offsets = [16, 0], sizes = [4, 128], strides = [1, 1]} : vector<32x128xf32> to vector<4x128xf32>
    %cst_36 = arith.constant dense<0.000000e+00> : vector<4x128xf32>
    %100 = tpu.matmul %97, %20, %cst_36 {dimension_numbers = #tpu.dot_dimension_numbers<[1], [0], [0], [1], [0, 0, 1, 1], [], []>} : vector<4x32xf32>, vector<32x128xf32>, vector<4x128xf32> -> vector<4x128xf32>
    %101 = arith.addf %99, %100 : vector<4x128xf32>
    %102 = arith.negf %101 : vector<4x128xf32>
    %103 = math.exp %102 : vector<4x128xf32>
    %cst_37 = arith.constant 1.000000e+00 : f32
    %104 = vector.broadcast %cst_37 : f32 to vector<4x128xf32>
    %105 = arith.addf %104, %103 : vector<4x128xf32>
    %106 = arith.divf %104, %105 : vector<4x128xf32>
    %107 = math.tanh %101 : vector<4x128xf32>
    %108 = vector.extract_strided_slice %106 {offsets = [0, 0], sizes = [4, 32], strides = [1, 1]} : vector<4x128xf32> to vector<4x32xf32>
    %109 = vector.extract_strided_slice %106 {offsets = [0, 32], sizes = [4, 32], strides = [1, 1]} : vector<4x128xf32> to vector<4x32xf32>
    %110 = vector.extract_strided_slice %107 {offsets = [0, 64], sizes = [4, 32], strides = [1, 1]} : vector<4x128xf32> to vector<4x32xf32>
    %111 = vector.extract_strided_slice %106 {offsets = [0, 96], sizes = [4, 32], strides = [1, 1]} : vector<4x128xf32> to vector<4x32xf32>
    %112 = arith.mulf %109, %95 : vector<4x32xf32>
    %113 = arith.mulf %108, %110 : vector<4x32xf32>
    %114 = arith.addf %112, %113 : vector<4x32xf32>
    %115 = math.tanh %114 : vector<4x32xf32>
    %116 = arith.mulf %111, %115 : vector<4x32xf32>
    %c16 = arith.constant 16 : index
    %c0_38 = arith.constant 0 : index
    %117 = vector.load %arg18[%c16, %c0_38] : memref<32x32xf32, #tpu.memory_space<vmem>>, vector<4x32xf32>
    tpu.vector_store %arg18[%c16, %c0_38], %116 {strides = array<i32>} : memref<32x32xf32, #tpu.memory_space<vmem>>, vector<4x32xf32>,
    %118 = vector.extract_strided_slice %19 {offsets = [20, 0], sizes = [4, 128], strides = [1, 1]} : vector<32x128xf32> to vector<4x128xf32>
    %cst_39 = arith.constant dense<0.000000e+00> : vector<4x128xf32>
    %119 = tpu.matmul %116, %20, %cst_39 {dimension_numbers = #tpu.dot_dimension_numbers<[1], [0], [0], [1], [0, 0, 1, 1], [], []>} : vector<4x32xf32>, vector<32x128xf32>, vector<4x128xf32> -> vector<4x128xf32>
    %120 = arith.addf %118, %119 : vector<4x128xf32>
    %121 = arith.negf %120 : vector<4x128xf32>
    %122 = math.exp %121 : vector<4x128xf32>
    %cst_40 = arith.constant 1.000000e+00 : f32
    %123 = vector.broadcast %cst_40 : f32 to vector<4x128xf32>
    %124 = arith.addf %123, %122 : vector<4x128xf32>
    %125 = arith.divf %123, %124 : vector<4x128xf32>
    %126 = math.tanh %120 : vector<4x128xf32>
    %127 = vector.extract_strided_slice %125 {offsets = [0, 0], sizes = [4, 32], strides = [1, 1]} : vector<4x128xf32> to vector<4x32xf32>
    %128 = vector.extract_strided_slice %125 {offsets = [0, 32], sizes = [4, 32], strides = [1, 1]} : vector<4x128xf32> to vector<4x32xf32>
    %129 = vector.extract_strided_slice %126 {offsets = [0, 64], sizes = [4, 32], strides = [1, 1]} : vector<4x128xf32> to vector<4x32xf32>
    %130 = vector.extract_strided_slice %125 {offsets = [0, 96], sizes = [4, 32], strides = [1, 1]} : vector<4x128xf32> to vector<4x32xf32>
    %131 = arith.mulf %128, %114 : vector<4x32xf32>
    %132 = arith.mulf %127, %129 : vector<4x32xf32>
    %133 = arith.addf %131, %132 : vector<4x32xf32>
    %134 = math.tanh %133 : vector<4x32xf32>
    %135 = arith.mulf %130, %134 : vector<4x32xf32>
    %c20 = arith.constant 20 : index
    %c0_41 = arith.constant 0 : index
    %136 = vector.load %arg18[%c20, %c0_41] : memref<32x32xf32, #tpu.memory_space<vmem>>, vector<4x32xf32>
    tpu.vector_store %arg18[%c20, %c0_41], %135 {strides = array<i32>} : memref<32x32xf32, #tpu.memory_space<vmem>>, vector<4x32xf32>,
    %137 = vector.extract_strided_slice %19 {offsets = [24, 0], sizes = [4, 128], strides = [1, 1]} : vector<32x128xf32> to vector<4x128xf32>
    %cst_42 = arith.constant dense<0.000000e+00> : vector<4x128xf32>
    %138 = tpu.matmul %135, %20, %cst_42 {dimension_numbers = #tpu.dot_dimension_numbers<[1], [0], [0], [1], [0, 0, 1, 1], [], []>} : vector<4x32xf32>, vector<32x128xf32>, vector<4x128xf32> -> vector<4x128xf32>
    %139 = arith.addf %137, %138 : vector<4x128xf32>
    %140 = arith.negf %139 : vector<4x128xf32>
    %141 = math.exp %140 : vector<4x128xf32>
    %cst_43 = arith.constant 1.000000e+00 : f32
    %142 = vector.broadcast %cst_43 : f32 to vector<4x128xf32>
    %143 = arith.addf %142, %141 : vector<4x128xf32>
    %144 = arith.divf %142, %143 : vector<4x128xf32>
    %145 = math.tanh %139 : vector<4x128xf32>
    %146 = vector.extract_strided_slice %144 {offsets = [0, 0], sizes = [4, 32], strides = [1, 1]} : vector<4x128xf32> to vector<4x32xf32>
    %147 = vector.extract_strided_slice %144 {offsets = [0, 32], sizes = [4, 32], strides = [1, 1]} : vector<4x128xf32> to vector<4x32xf32>
    %148 = vector.extract_strided_slice %145 {offsets = [0, 64], sizes = [4, 32], strides = [1, 1]} : vector<4x128xf32> to vector<4x32xf32>
    %149 = vector.extract_strided_slice %144 {offsets = [0, 96], sizes = [4, 32], strides = [1, 1]} : vector<4x128xf32> to vector<4x32xf32>
    %150 = arith.mulf %147, %133 : vector<4x32xf32>
    %151 = arith.mulf %146, %148 : vector<4x32xf32>
    %152 = arith.addf %150, %151 : vector<4x32xf32>
    %153 = math.tanh %152 : vector<4x32xf32>
    %154 = arith.mulf %149, %153 : vector<4x32xf32>
    %c24 = arith.constant 24 : index
    %c0_44 = arith.constant 0 : index
    %155 = vector.load %arg18[%c24, %c0_44] : memref<32x32xf32, #tpu.memory_space<vmem>>, vector<4x32xf32>
    tpu.vector_store %arg18[%c24, %c0_44], %154 {strides = array<i32>} : memref<32x32xf32, #tpu.memory_space<vmem>>, vector<4x32xf32>,
    %156 = vector.extract_strided_slice %19 {offsets = [28, 0], sizes = [4, 128], strides = [1, 1]} : vector<32x128xf32> to vector<4x128xf32>
    %cst_45 = arith.constant dense<0.000000e+00> : vector<4x128xf32>
    %157 = tpu.matmul %154, %20, %cst_45 {dimension_numbers = #tpu.dot_dimension_numbers<[1], [0], [0], [1], [0, 0, 1, 1], [], []>} : vector<4x32xf32>, vector<32x128xf32>, vector<4x128xf32> -> vector<4x128xf32>
    %158 = arith.addf %156, %157 : vector<4x128xf32>
    %159 = arith.negf %158 : vector<4x128xf32>
    %160 = math.exp %159 : vector<4x128xf32>
    %cst_46 = arith.constant 1.000000e+00 : f32
    %161 = vector.broadcast %cst_46 : f32 to vector<4x128xf32>
    %162 = arith.addf %161, %160 : vector<4x128xf32>
    %163 = arith.divf %161, %162 : vector<4x128xf32>
    %164 = math.tanh %158 : vector<4x128xf32>
    %165 = vector.extract_strided_slice %163 {offsets = [0, 0], sizes = [4, 32], strides = [1, 1]} : vector<4x128xf32> to vector<4x32xf32>
    %166 = vector.extract_strided_slice %163 {offsets = [0, 32], sizes = [4, 32], strides = [1, 1]} : vector<4x128xf32> to vector<4x32xf32>
    %167 = vector.extract_strided_slice %164 {offsets = [0, 64], sizes = [4, 32], strides = [1, 1]} : vector<4x128xf32> to vector<4x32xf32>
    %168 = vector.extract_strided_slice %163 {offsets = [0, 96], sizes = [4, 32], strides = [1, 1]} : vector<4x128xf32> to vector<4x32xf32>
    %169 = arith.mulf %166, %152 : vector<4x32xf32>
    %170 = arith.mulf %165, %167 : vector<4x32xf32>
    %171 = arith.addf %169, %170 : vector<4x32xf32>
    %172 = math.tanh %171 : vector<4x32xf32>
    %173 = arith.mulf %168, %172 : vector<4x32xf32>
    %c28 = arith.constant 28 : index
    %c0_47 = arith.constant 0 : index
    %174 = vector.load %arg18[%c28, %c0_47] : memref<32x32xf32, #tpu.memory_space<vmem>>, vector<4x32xf32>
    tpu.vector_store %arg18[%c28, %c0_47], %173 {strides = array<i32>} : memref<32x32xf32, #tpu.memory_space<vmem>>, vector<4x32xf32>,
    %c0_48 = arith.constant 0 : index
    %c0_49 = arith.constant 0 : index
    %175 = vector.load %arg16[%c0_48, %c0_49] : memref<4x32xf32, #tpu.memory_space<vmem>>, vector<4x32xf32>
    tpu.vector_store %arg16[%c0_48, %c0_49], %173 {strides = array<i32>} : memref<4x32xf32, #tpu.memory_space<vmem>>, vector<4x32xf32>,
    %c0_50 = arith.constant 0 : index
    %c0_51 = arith.constant 0 : index
    %176 = vector.load %arg17[%c0_50, %c0_51] : memref<4x32xf32, #tpu.memory_space<vmem>>, vector<4x32xf32>
    tpu.vector_store %arg17[%c0_50, %c0_51], %171 {strides = array<i32>} : memref<4x32xf32, #tpu.memory_space<vmem>>, vector<4x32xf32>,
    %c0_52 = arith.constant 0 : index
    %c0_53 = arith.constant 0 : index
    %177 = vector.load %arg18[%c0_52, %c0_53] : memref<32x32xf32, #tpu.memory_space<vmem>>, vector<32x32xf32>
    %cst_54 = arith.constant 0.000000e+00 : f32
    %178 = vector.broadcast %cst_54 : f32 to vector<32x32xf32>
    %179 = arith.maximumf %177, %178 : vector<32x32xf32>
    %c0_55 = arith.constant 0 : index
    %c0_56 = arith.constant 0 : index
    %180 = vector.load %arg11[%c0_55, %c0_56] : memref<32x32xf32, #tpu.memory_space<vmem>>, vector<32x32xf32>
    %cst_57 = arith.constant dense<0.000000e+00> : vector<32x32xf32>
    %181 = tpu.matmul %179, %180, %cst_57 {dimension_numbers = #tpu.dot_dimension_numbers<[1], [0], [0], [1], [0, 0, 1, 1], [], []>} : vector<32x32xf32>, vector<32x32xf32>, vector<32x32xf32> -> vector<32x32xf32>
    %c0_58 = arith.constant 0 : index
    %c0_59 = arith.constant 0 : index
    %182 = vector.load %arg12[%c0_58, %c0_59] : memref<1x32xf32, #tpu.memory_space<vmem>>, vector<1x32xf32>
    %183 = vector.broadcast %182 : vector<1x32xf32> to vector<32x32xf32>
    %184 = arith.addf %181, %183 : vector<32x32xf32>
    %cst_60 = arith.constant 0.000000e+00 : f32
    %185 = vector.broadcast %cst_60 : f32 to vector<32x32xf32>
    %186 = arith.maximumf %184, %185 : vector<32x32xf32>
    %c0_61 = arith.constant 0 : index
    %c0_62 = arith.constant 0 : index
    %187 = vector.load %arg13[%c0_61, %c0_62] : memref<32x8xf32, #tpu.memory_space<vmem>>, vector<32x8xf32>
    %cst_63 = arith.constant dense<0.000000e+00> : vector<32x8xf32>
    %188 = tpu.matmul %186, %187, %cst_63 {dimension_numbers = #tpu.dot_dimension_numbers<[1], [0], [0], [1], [0, 0, 1, 1], [], []>} : vector<32x32xf32>, vector<32x8xf32>, vector<32x8xf32> -> vector<32x8xf32>
    %c0_64 = arith.constant 0 : index
    %c0_65 = arith.constant 0 : index
    %189 = vector.load %arg14[%c0_64, %c0_65] : memref<1x8xf32, #tpu.memory_space<vmem>>, vector<1x8xf32>
    %190 = vector.broadcast %189 : vector<1x8xf32> to vector<32x8xf32>
    %191 = arith.addf %188, %190 : vector<32x8xf32>
    %cst_66 = arith.constant dense<0xFF800000> : vector<32xf32>
    %192 = vector.multi_reduction <maximumf>, %191, %cst_66 [1] : vector<32x8xf32> to vector<32xf32>
    %193 = vector.shape_cast %192 : vector<32xf32> to vector<32x1xf32>
    %194 = vector.broadcast %193 : vector<32x1xf32> to vector<32x8xf32>
    %195 = arith.subf %191, %194 : vector<32x8xf32>
    %196 = math.exp %195 : vector<32x8xf32>
    %cst_67 = arith.constant dense<0.000000e+00> : vector<32xf32>
    %197 = vector.multi_reduction <add>, %196, %cst_67 [1] : vector<32x8xf32> to vector<32xf32>
    %198 = vector.shape_cast %197 : vector<32xf32> to vector<32x1xf32>
    %199 = math.log %198 : vector<32x1xf32>
    %200 = arith.addf %199, %193 : vector<32x1xf32>
    %201 = vector.broadcast %200 : vector<32x1xf32> to vector<32x8xf32>
    %202 = arith.subf %191, %201 : vector<32x8xf32>
    %c0_68 = arith.constant 0 : index
    %c0_69 = arith.constant 0 : index
    %203 = vector.load %arg15[%c0_68, %c0_69] : memref<32x8xf32, #tpu.memory_space<vmem>>, vector<32x8xf32>
    tpu.vector_store %arg15[%c0_68, %c0_69], %202 {strides = array<i32>} : memref<32x8xf32, #tpu.memory_space<vmem>>, vector<32x8xf32>,
    return
  }
  func.func @transform_0(%arg0: i32) -> (i32, i32) {
    %c0_i32 = arith.constant 0 : i32
    %c0_i32_0 = arith.constant 0 : i32
    %c0_i32_1 = arith.constant 0 : i32
    return %c0_i32, %c0_i32_0 : i32, i32
  }
  func.func @transform_1(%arg0: i32) -> (i32, i32) {
    %c0_i32 = arith.constant 0 : i32
    %c0_i32_0 = arith.constant 0 : i32
    %c0_i32_1 = arith.constant 0 : i32
    return %c0_i32, %c0_i32_0 : i32, i32
  }
  func.func @transform_2(%arg0: i32) -> (i32, i32) {
    %c0_i32 = arith.constant 0 : i32
    %c0_i32_0 = arith.constant 0 : i32
    %c0_i32_1 = arith.constant 0 : i32
    return %c0_i32, %c0_i32_0 : i32, i32
  }
  func.func @transform_3(%arg0: i32) -> (i32, i32) {
    %c0_i32 = arith.constant 0 : i32
    %c0_i32_0 = arith.constant 0 : i32
    %c0_i32_1 = arith.constant 0 : i32
    return %c0_i32, %c0_i32_0 : i32, i32
  }
  func.func @transform_4(%arg0: i32) -> (i32, i32) {
    %c0_i32 = arith.constant 0 : i32
    %c0_i32_0 = arith.constant 0 : i32
    %c0_i32_1 = arith.constant 0 : i32
    return %c0_i32, %c0_i32_0 : i32, i32
  }
  func.func @transform_5(%arg0: i32) -> (i32, i32) {
    %c0_i32 = arith.constant 0 : i32
    %c0_i32_0 = arith.constant 0 : i32
    %c0_i32_1 = arith.constant 0 : i32
    return %c0_i32, %c0_i32_0 : i32, i32
  }
  func.func @transform_6(%arg0: i32) -> (i32, i32) {
    %c0_i32 = arith.constant 0 : i32
    %c0_i32_0 = arith.constant 0 : i32
    %c0_i32_1 = arith.constant 0 : i32
    return %c0_i32, %c0_i32_0 : i32, i32
  }
  func.func @transform_7(%arg0: i32) -> (i32, i32) {
    %c0_i32 = arith.constant 0 : i32
    %c0_i32_0 = arith.constant 0 : i32
    %c0_i32_1 = arith.constant 0 : i32
    return %c0_i32, %c0_i32_0 : i32, i32
  }
  func.func @transform_8(%arg0: i32) -> (i32, i32) {
    %c0_i32 = arith.constant 0 : i32
    %c0_i32_0 = arith.constant 0 : i32
    %c0_i32_1 = arith.constant 0 : i32
    return %c0_i32, %c0_i32_0 : i32, i32
  }
  func.func @transform_9(%arg0: i32) -> (i32, i32) {
    %c0_i32 = arith.constant 0 : i32
    %c0_i32_0 = arith.constant 0 : i32
    %c0_i32_1 = arith.constant 0 : i32
    return %c0_i32, %c0_i32_0 : i32, i32
  }
  func.func @transform_10(%arg0: i32) -> (i32, i32) {
    %c0_i32 = arith.constant 0 : i32
    %c0_i32_0 = arith.constant 0 : i32
    %c0_i32_1 = arith.constant 0 : i32
    return %c0_i32, %c0_i32_0 : i32, i32
  }
  func.func @transform_11(%arg0: i32) -> (i32, i32) {
    %c0_i32 = arith.constant 0 : i32
    %c0_i32_0 = arith.constant 0 : i32
    %c0_i32_1 = arith.constant 0 : i32
    return %c0_i32, %c0_i32_0 : i32, i32
  }
  func.func @transform_12(%arg0: i32) -> (i32, i32) {
    %c0_i32 = arith.constant 0 : i32
    %c0_i32_0 = arith.constant 0 : i32
    %c0_i32_1 = arith.constant 0 : i32
    return %c0_i32, %c0_i32_0 : i32, i32
  }
  func.func @transform_13(%arg0: i32) -> (i32, i32) {
    %c0_i32 = arith.constant 0 : i32
    %c0_i32_0 = arith.constant 0 : i32
    %c0_i32_1 = arith.constant 0 : i32
    return %c0_i32, %c0_i32_0 : i32, i32
  }
  func.func @transform_14(%arg0: i32) -> (i32, i32) {
    %c0_i32 = arith.constant 0 : i32
    %c0_i32_0 = arith.constant 0 : i32
    %c0_i32_1 = arith.constant 0 : i32
    return %c0_i32, %c0_i32_0 : i32, i32
  }
  func.func @transform_15(%arg0: i32) -> (i32, i32) {
    %c0_i32 = arith.constant 0 : i32
    %c0_i32_0 = arith.constant 0 : i32
    %c0_i32_1 = arith.constant 0 : i32
    return %c0_i32, %c0_i32_0 : i32, i32
  }
  func.func @transform_16(%arg0: i32) -> (i32, i32) {
    %c0_i32 = arith.constant 0 : i32
    %c0_i32_0 = arith.constant 0 : i32
    %c0_i32_1 = arith.constant 0 : i32
    return %c0_i32, %c0_i32_0 : i32, i32
  }
}

</mosaic_0001>

<llo_original>
// kernel: lstm_policy_forward.1
$region0: #{lstm_policy_forward.1}
  #allocation0 [shape = 'u32[]', space=smem, size = 0x4, offset = 0x4, fixed_abs, tag = 'smem constant byte address 0x4 - core index']
  #allocation1 [shape = 'u32[144,128]{1,0:T(1,128)}', space=vmem, size = 0x12000, scoped, tag = 'internal scratch']
  #allocation2 [shape = 'f32[32,32]{1,0:T(8,128)}', space=vmem, size = 0x4000, scoped, tag = 'scratch operand']
  %s0 = inlined_call_operand.vmem [shape: f32[32,16], index: 0, kind: input, shape index: {}]
  %s1 = inlined_call_operand.vmem [shape: f32[4,32], index: 1, kind: input, shape index: {}]
  %s2 = inlined_call_operand.vmem [shape: f32[4,32], index: 2, kind: input, shape index: {}]
  %s3 = inlined_call_operand.hbm [shape: f32[16,32], index: 3, kind: input, shape index: {}]
  %s4 = inlined_call_operand.vmem [shape: f32[1,32], index: 4, kind: input, shape index: {}]
  %s5 = inlined_call_operand.vmem [shape: f32[32,32], index: 5, kind: input, shape index: {}]
  %s6 = inlined_call_operand.hbm [shape: f32[1,32], index: 6, kind: input, shape index: {}]
  %s7 = inlined_call_operand.hbm [shape: f32[32,128], index: 7, kind: input, shape index: {}]
  %s8 = inlined_call_operand.hbm [shape: f32[32,128], index: 8, kind: input, shape index: {}]
  %s9 = inlined_call_operand.vmem [shape: f32[1,128], index: 9, kind: input, shape index: {}]
  %s10 = inlined_call_operand.hbm [shape: f32[32,32], index: 10, kind: input, shape index: {}]
  %s11 = inlined_call_operand.hbm [shape: f32[1,32], index: 11, kind: input, shape index: {}]
  %s12 = inlined_call_operand.vmem [shape: f32[32,8], index: 12, kind: input, shape index: {}]
  %s13 = inlined_call_operand.hbm [shape: f32[1,8], index: 13, kind: input, shape index: {}]
  %s14 = inlined_call_operand.hbm [shape: f32[32,8], index: 14, kind: output, shape index: {0}]
  %s15 = inlined_call_operand.hbm [shape: f32[4,32], index: 15, kind: output, shape index: {1}]
  %s16 = inlined_call_operand.hbm [shape: f32[4,32], index: 16, kind: output, shape index: {2}]
  %17 = xla_tuple %s14, %s15, %s16
  %s18 = sld [smem:[#allocation0]]
  $region110: #{lstm_policy_forward.1} parent=0
    _
  %s20 = ssub.s32 1, %s18
  %s21 = scalar_select 0, %s20, %s18
  $region1: #{lstm_policy_forward.1} parent=0
    #allocation3 [shape = 'u8[8192]{0}', space=vmem, size = 0x2000, scoped, tag = 'input window, operand 3, single buffered']
    #allocation4 [shape = 's32[1]{0}', space=sflag, size = 0x4, scoped, tag = 'scoped memory for lstm_policy_forward.1']
    #allocation5 [shape = 's32[1]{0}', space=sflag, size = 0x4, scoped, tag = 'scoped memory for lstm_policy_forward.1']
    #allocation6 [shape = 'u8[512]{0}', space=vmem, size = 0x400, scoped, tag = 'input window, operand 6, single buffered']
    #allocation7 [shape = 's32[1]{0}', space=sflag, size = 0x4, scoped, tag = 'scoped memory for lstm_policy_forward.1']
    #allocation8 [shape = 'u8[16384]{0}', space=vmem, size = 0x4000, scoped, tag = 'input window, operand 7, single buffered']
    #allocation9 [shape = 'u8[16384]{0}', space=vmem, size = 0x4000, scoped, tag = 'input window, operand 8, single buffered']
    #allocation10 [shape = 's32[1]{0}', space=sflag, size = 0x4, scoped, tag = 'scoped memory for lstm_policy_forward.1']
    #allocation11 [shape = 'u8[16384]{0}', space=vmem, size = 0x4000, scoped, tag = 'input window, operand 10, single buffered']
    #allocation12 [shape = 'u8[512]{0}', space=vmem, size = 0x400, scoped, tag = 'input window, operand 11, single buffered']
    #allocation13 [shape = 's32[1]{0}', space=sflag, size = 0x4, scoped, tag = 'scoped memory for lstm_policy_forward.1']
    #allocation14 [shape = 'u8[512]{0}', space=vmem, size = 0x400, scoped, tag = 'input window, operand 13, single buffered']
    #allocation15 [shape = 'u8[16384]{0}', space=vmem, size = 0x4000, scoped, tag = 'output window, operand 0, single buffered']
    #allocation16 [shape = 'u8[2048]{0}', space=vmem, size = 0x800, scoped, tag = 'output window, operand 1, single buffered']
    #allocation17 [shape = 's32[1]{0}', space=sflag, size = 0x4, scoped, tag = 'scoped memory for lstm_policy_forward.1']
    #allocation18 [shape = 'u8[2048]{0}', space=vmem, size = 0x800, scoped, tag = 'output window, operand 2, single buffered']
    %22 = vsyncpa [#allocation4], 0
    %23 = vsyncpa [#allocation7], 0
    %24 = vsyncpa [#allocation10], 0
    %25 = vsyncpa [#allocation13], 0
    %26 = vsyncpa [#allocation5], 0
    %27 = vsyncpa [#allocation17], 0
    // Predicated region
    $region2: #{lstm_policy_forward.1} parent=1 // pred_check
      _
    $region3: #{lstm_policy_forward.1} parent=1 // pred_check_branch
      %29 = sbr.rel (0) target = $region5
    $region4: #{lstm_policy_forward.1} parent=1 // pred_region
      _
    $region5: #{lstm_policy_forward.1} parent=1 // pred_fallthru
      _
    // Predicated region
    $region6: #{lstm_policy_forward.1} parent=1 // pred_check
      _
    $region7: #{lstm_policy_forward.1} parent=1 // pred_check_branch
      %31 = sbr.rel (0) target = $region9
    $region8: #{lstm_policy_forward.1} parent=1 // pred_region
      _
    $region9: #{lstm_policy_forward.1} parent=1 // pred_fallthru
      _
    // Predicated region
    $region10: #{lstm_policy_forward.1} parent=1 // pred_check
      _
    $region11: #{lstm_policy_forward.1} parent=1 // pred_check_branch
      %33 = sbr.rel (0) target = $region13
    $region12: #{lstm_policy_forward.1} parent=1 // pred_region
      _
    $region13: #{lstm_policy_forward.1} parent=1 // pred_fallthru
      _
    // Predicated region
    $region14: #{lstm_policy_forward.1} parent=1 // pred_check
      _
    $region15: #{lstm_policy_forward.1} parent=1 // pred_check_branch
      %35 = sbr.rel (0) target = $region17
    $region16: #{lstm_policy_forward.1} parent=1 // pred_region
      %s37 = ssub.s32 256, 256
      %38 = vsyncadd [#allocation4], %s37
      %s39 = sshll.u32 [#allocation3], 4
      %s40 = int_to_ptr.vmem [resolvable:$true] %s39
      %45 = dma.hbm_to_vmem [thread:$0]  %s3, 256, %s40, [#allocation4], 128, 128, 8
    $region17: #{lstm_policy_forward.1} parent=1 // pred_fallthru
      _
    // Predicated region
    $region18: #{lstm_policy_forward.1} parent=1 // pred_check
      _
    $region19: #{lstm_policy_forward.1} parent=1 // pred_check_branch
      %47 = sbr.rel (0) target = $region21
    $region20: #{lstm_policy_forward.1} parent=1 // pred_region
      _
    $region21: #{lstm_policy_forward.1} parent=1 // pred_fallthru
      _
    // Predicated region
    $region22: #{lstm_policy_forward.1} parent=1 // pred_check
      _
    $region23: #{lstm_policy_forward.1} parent=1 // pred_check_branch
      %49 = sbr.rel (0) target = $region25
    $region24: #{lstm_policy_forward.1} parent=1 // pred_region
      _
    $region25: #{lstm_policy_forward.1} parent=1 // pred_fallthru
      _
    // Predicated region
    $region26: #{lstm_policy_forward.1} parent=1 // pred_check
      _
    $region27: #{lstm_policy_forward.1} parent=1 // pred_check_branch
      %51 = sbr.rel (0) target = $region29
    $region28: #{lstm_policy_forward.1} parent=1 // pred_region
      %s53 = ssub.s32 16, 16
      %54 = vsyncadd [#allocation7], %s53
      %s56 = sshll.u32 [#allocation6], 4
      %s57 = int_to_ptr.vmem [resolvable:$true] %s56
      %59 = dma.hbm_to_vmem [thread:$0]  %s6, 16, %s57, [#allocation7]
    $region29: #{lstm_policy_forward.1} parent=1 // pred_fallthru
      _
    // Predicated region
    $region30: #{lstm_policy_forward.1} parent=1 // pred_check
      _
    $region31: #{lstm_policy_forward.1} parent=1 // pred_check_branch
      %61 = sbr.rel (0) target = $region33
    $region32: #{lstm_policy_forward.1} parent=1 // pred_region
      %s63 = ssub.s32 512, 512
      %64 = vsyncadd [#allocation7], %s63
      %s65 = sshll.u32 [#allocation8], 4
      %s66 = int_to_ptr.vmem [resolvable:$true] %s65
      %71 = dma.hbm_to_vmem [thread:$0]  %s7, 512, %s66, [#allocation7], 128, 128, 8
    $region33: #{lstm_policy_forward.1} parent=1 // pred_fallthru
      _
    // Predicated region
    $region34: #{lstm_policy_forward.1} parent=1 // pred_check
      _
    $region35: #{lstm_policy_forward.1} parent=1 // pred_check_branch
      %73 = sbr.rel (0) target = $region37
    $region36: #{lstm_policy_forward.1} parent=1 // pred_region
      %s75 = ssub.s32 512, 512
      %76 = vsyncadd [#allocation10], %s75
      %s77 = sshll.u32 [#allocation9], 4
      %s78 = int_to_ptr.vmem [resolvable:$true] %s77
      %83 = dma.hbm_to_vmem [thread:$0]  %s8, 512, %s78, [#allocation10], 128, 128, 8
    $region37: #{lstm_policy_forward.1} parent=1 // pred_fallthru
      _
    // Predicated region
    $region38: #{lstm_policy_forward.1} parent=1 // pred_check
      _
    $region39: #{lstm_policy_forward.1} parent=1 // pred_check_branch
      %85 = sbr.rel (0) target = $region41
    $region40: #{lstm_policy_forward.1} parent=1 // pred_region
      _
    $region41: #{lstm_policy_forward.1} parent=1 // pred_fallthru
      _
    // Predicated region
    $region42: #{lstm_policy_forward.1} parent=1 // pred_check
      _
    $region43: #{lstm_policy_forward.1} parent=1 // pred_check_branch
      %87 = sbr.rel (0) target = $region45
    $region44: #{lstm_policy_forward.1} parent=1 // pred_region
      %s89 = ssub.s32 512, 512
      %90 = vsyncadd [#allocation10], %s89
      %s91 = sshll.u32 [#allocation11], 4
      %s92 = int_to_ptr.vmem [resolvable:$true] %s91
      %97 = dma.hbm_to_vmem [thread:$0]  %s10, 512, %s92, [#allocation10], 128, 128, 8
    $region45: #{lstm_policy_forward.1} parent=1 // pred_fallthru
      _
    // Predicated region
    $region46: #{lstm_policy_forward.1} parent=1 // pred_check
      _
    $region47: #{lstm_policy_forward.1} parent=1 // pred_check_branch
      %99 = sbr.rel (0) target = $region49
    $region48: #{lstm_policy_forward.1} parent=1 // pred_region
      %s101 = ssub.s32 16, 16
      %102 = vsyncadd [#allocation13], %s101
      %s104 = sshll.u32 [#allocation12], 4
      %s105 = int_to_ptr.vmem [resolvable:$true] %s104
      %107 = dma.hbm_to_vmem [thread:$0]  %s11, 16, %s105, [#allocation13]
    $region49: #{lstm_policy_forward.1} parent=1 // pred_fallthru
      _
    // Predicated region
    $region50: #{lstm_policy_forward.1} parent=1 // pred_check
      _
    $region51: #{lstm_policy_forward.1} parent=1 // pred_check_branch
      %109 = sbr.rel (0) target = $region53
    $region52: #{lstm_policy_forward.1} parent=1 // pred_region
      _
    $region53: #{lstm_policy_forward.1} parent=1 // pred_fallthru
      _
    // Predicated region
    $region54: #{lstm_policy_forward.1} parent=1 // pred_check
      _
    $region55: #{lstm_policy_forward.1} parent=1 // pred_check_branch
      %111 = sbr.rel (0) target = $region57
    $region56: #{lstm_policy_forward.1} parent=1 // pred_region
      %s113 = ssub.s32 16, 16
      %114 = vsyncadd [#allocation13], %s113
      %s116 = sshll.u32 [#allocation14], 4
      %s117 = int_to_ptr.vmem [resolvable:$true] %s116
      %119 = dma.hbm_to_vmem [thread:$0]  %s13, 16, %s117, [#allocation13]
    $region57: #{lstm_policy_forward.1} parent=1 // pred_fallthru
      _
    // Predicated region
    $region58: #{lstm_policy_forward.1} parent=1 // pred_check
      _
    $region59: #{lstm_policy_forward.1} parent=1 // pred_check_branch
      %121 = sbr.rel (0) target = $region61
    $region60: #{lstm_policy_forward.1} parent=1 // pred_region
      %122 = dma.done [#allocation4], 256
    $region61: #{lstm_policy_forward.1} parent=1 // pred_fallthru
      _
    // Predicated region
    $region62: #{lstm_policy_forward.1} parent=1 // pred_check
      _
    $region63: #{lstm_policy_forward.1} parent=1 // pred_check_branch
      %124 = sbr.rel (0) target = $region65
    $region64: #{lstm_policy_forward.1} parent=1 // pred_region
      %125 = dma.done [#allocation7], 16
    $region65: #{lstm_policy_forward.1} parent=1 // pred_fallthru
      _
    // Predicated region
    $region66: #{lstm_policy_forward.1} parent=1 // pred_check
      _
    $region67: #{lstm_policy_forward.1} parent=1 // pred_check_branch
      %127 = sbr.rel (0) target = $region69
    $region68: #{lstm_policy_forward.1} parent=1 // pred_region
      %128 = dma.done [#allocation7], 512
    $region69: #{lstm_policy_forward.1} parent=1 // pred_fallthru
      _
    // Predicated region
    $region70: #{lstm_policy_forward.1} parent=1 // pred_check
      _
    $region71: #{lstm_policy_forward.1} parent=1 // pred_check_branch
      %130 = sbr.rel (0) target = $region73
    $region72: #{lstm_policy_forward.1} parent=1 // pred_region
      %131 = dma.done [#allocation10], 512
    $region73: #{lstm_policy_forward.1} parent=1 // pred_fallthru
      _
    // Predicated region
    $region74: #{lstm_policy_forward.1} parent=1 // pred_check
      _
    $region75: #{lstm_policy_forward.1} parent=1 // pred_check_branch
      %133 = sbr.rel (0) target = $region77
    $region76: #{lstm_policy_forward.1} parent=1 // pred_region
      %134 = dma.done [#allocation10], 512
    $region77: #{lstm_policy_forward.1} parent=1 // pred_fallthru
      _
    // Predicated region
    $region78: #{lstm_policy_forward.1} parent=1 // pred_check
      _
    $region79: #{lstm_policy_forward.1} parent=1 // pred_check_branch
      %136 = sbr.rel (0) target = $region81
    $region80: #{lstm_policy_forward.1} parent=1 // pred_region
      %137 = dma.done [#allocation13], 16
    $region81: #{lstm_policy_forward.1} parent=1 // pred_fallthru
      _
    // Predicated region
    $region82: #{lstm_policy_forward.1} parent=1 // pred_check
      _
    $region83: #{lstm_policy_forward.1} parent=1 // pred_check_branch
      %139 = sbr.rel (0) target = $region85
    $region84: #{lstm_policy_forward.1} parent=1 // pred_region
      %140 = dma.done [#allocation13], 16
    $region85: #{lstm_policy_forward.1} parent=1 // pred_fallthru
      _
    %v141 = vld [vmem:[%s0] sm:$0xff]
    %v142 = vld [vmem:[%s0 + $0x8] sm:$0xff]
    %v143 = vld [vmem:[%s0 + $0x10] sm:$0xff]
    %v144 = vld [vmem:[%s0 + $0x18] sm:$0xff]
    %v145 = vld [vmem:[#allocation3] sm:$0xff]
    %v146 = vld [vmem:[#allocation3 + $0x8] sm:$0xff]
    %v147 = vld [vmem:[%s4] sm:$0x1]
    %v149 = vlaneseq
    %v150 = vshrl.u32 %v149, 7
    %v151 = vsub.s32 0, %v150
    %v152 = vrot.slane %v147, %v151
    %vm154 = vcmask 130048
    %v156 = vsel %vm154, %v141, 0
    %v159 = vsel %vm154, %v142, 0
    %v162 = vsel %vm154, %v143, 0
    %v165 = vsel %vm154, %v144, 0
    %167 = vmatprep.subr.mxu0 0.0
    %168 = vmatpush1.msra.mxu0 %v145
    %169 = vmatprep.subr.mxu0 0.0
    %170 = vmatpush1.msra.mxu0 %v146
    %171 = vmatprep.subr.mxu0 0.0
    %172 = vmatpush1.msra.mxu0 0.0
    %173 = vmatprep.subr.mxu0 0.0
    %174 = vmatpush1.msra.mxu0 0.0
    %175 = vmatprep.subr.mxu0 0.0
    %176 = vmatpush1.msra.mxu0 0.0
    %177 = vmatprep.subr.mxu0 0.0
    %178 = vmatpush1.msra.mxu0 0.0
    %179 = vmatprep.subr.mxu0 0.0
    %180 = vmatpush1.msra.mxu0 0.0
    %181 = vmatprep.subr.mxu0 0.0
    %182 = vmatpush1.msra.mxu0 0.0
    %183 = vmatprep.subr.mxu0 0.0
    %184 = vmatpush1.msra.mxu0 0.0
    %185 = vmatprep.subr.mxu0 0.0
    %186 = vmatpush1.msra.mxu0 0.0
    %187 = vmatprep.subr.mxu0 0.0
    %188 = vmatpush1.msra.mxu0 0.0
    %189 = vmatprep.subr.mxu0 0.0
    %190 = vmatpush1.msra.mxu0 0.0
    %191 = vmatprep.subr.mxu0 0.0
    %192 = vmatpush1.msra.mxu0 0.0
    %193 = vmatprep.subr.mxu0 0.0
    %194 = vmatpush1.msra.mxu0 0.0
    %195 = vmatprep.subr.mxu0 0.0
    %196 = vmatpush1.msra.mxu0 0.0
    %197 = vmatprep.subr.mxu0 0.0
    %198 = vmatpush1.msra.mxu0 0.0
    %199 = vmatprep.subr.mxu0 0.0
    %200 = vmatpush1.msra.mxu0 0.0
    %201 = vmatprep.subr.mxu0 0.0
    %202 = vmatpush1.msra.mxu0 0.0
    %203 = vmatprep.subr.mxu0 0.0
    %204 = vmatpush1.msra.mxu0 0.0
    %205 = vmatprep.subr.mxu0 0.0
    %206 = vmatpush1.msra.mxu0 0.0
    %207 = vmatprep.subr.mxu0 0.0
    %208 = vmatpush1.msra.mxu0 0.0
    %209 = vmatprep.subr.mxu0 0.0
    %210 = vmatpush1.msra.mxu0 0.0
    %211 = vmatprep.subr.mxu0 0.0
    %212 = vmatpush1.msra.mxu0 0.0
    %213 = vmatprep.subr.mxu0 0.0
    %214 = vmatpush1.msra.mxu0 0.0
    %215 = vmatprep.subr.mxu0 0.0
    %216 = vmatpush1.msra.mxu0 0.0
    %217 = vmatprep.subr.mxu0 0.0
    %218 = vmatpush1.msra.mxu0 0.0
    %219 = vmatprep.subr.mxu0 0.0
    %220 = vmatpush1.msra.mxu0 0.0
    %221 = vmatprep.subr.mxu0 0.0
    %222 = vmatpush1.msra.mxu0 0.0
    %223 = vmatprep.subr.mxu0 0.0
    %224 = vmatpush1.msra.mxu0 0.0
    %225 = vmatprep.subr.mxu0 0.0
    %226 = vmatpush1.msra.mxu0 0.0
    %227 = vmatprep.subr.mxu0 0.0
    %228 = vmatpush1.msra.mxu0 0.0
    %229 = vmatprep.subr.mxu0 0.0
    %230 = vmatpush1.msra.mxu0 0.0
    %231 = vmatprep.mubr.f32.mxu0 0.0
    %232 = vmatmul.mubr.f32.gmra.mrb[0].mxu0 %v156
    %v233 = vpop.f32.mrb[0].mxu0
    %v234 = vadd.f32 %v152, %v233
    %v235 = vpop.f32.mrb[0].mxu0
    %236 = vmatprep.mubr.f32.mxu0 0.0
    %237 = vmatmul.mubr.f32.gmra.mrb[0].mxu0 %v159
    %v238 = vpop.f32.mrb[0].mxu0
    %v239 = vadd.f32 %v152, %v238
    %v240 = vpop.f32.mrb[0].mxu0
    %241 = vmatprep.mubr.f32.mxu0 0.0
    %242 = vmatmul.mubr.f32.gmra.mrb[0].mxu0 %v162
    %v243 = vpop.f32.mrb[0].mxu0
    %v244 = vadd.f32 %v152, %v243
    %v245 = vpop.f32.mrb[0].mxu0
    %246 = vmatprep.mubr.f32.mxu0 0.0
    %247 = vmatmul.mubr.f32.gmra.mrb[0].mxu0 %v165
    %v248 = vpop.f32.mrb[0].mxu0
    %v249 = vadd.f32 %v152, %v248
    %v250 = vpop.f32.mrb[0].mxu0
    %251 = vdwg.mxu0
    %v252 = vmax.f32 %v234, 0.0
    %v253 = vmax.f32 %v239, 0.0
    %v254 = vmax.f32 %v244, 0.0
    %v255 = vmax.f32 %v249, 0.0
    %v256 = vld [vmem:[%s5] sm:$0xff]
    %v257 = vld [vmem:[%s5 + $0x8] sm:$0xff]
    %v258 = vld [vmem:[%s5 + $0x10] sm:$0xff]
    %v259 = vld [vmem:[%s5 + $0x18] sm:$0xff]
    %v260 = vld [vmem:[#allocation6] sm:$0x1]
    %v262 = vlaneseq
    %v263 = vshrl.u32 %v262, 7
    %v264 = vsub.s32 0, %v263
    %v265 = vrot.slane %v260, %v264
    %vm267 = vcmask 261120
    %v269 = vsel %vm267, %v252, 0
    %v272 = vsel %vm267, %v253, 0
    %v275 = vsel %vm267, %v254, 0
    %v278 = vsel %vm267, %v255, 0
    %280 = vmatprep.subr.mxu0 0.0
    %281 = vmatpush1.msra.mxu0 %v256
    %282 = vmatprep.subr.mxu0 0.0
    %283 = vmatpush1.msra.mxu0 %v257
    %284 = vmatprep.subr.mxu0 0.0
    %285 = vmatpush1.msra.mxu0 %v258
    %286 = vmatprep.subr.mxu0 0.0
    %287 = vmatpush1.msra.mxu0 %v259
    %288 = vmatprep.subr.mxu0 0.0
    %289 = vmatpush1.msra.mxu0 0.0
    %290 = vmatprep.subr.mxu0 0.0
    %291 = vmatpush1.msra.mxu0 0.0
    %292 = vmatprep.subr.mxu0 0.0
    %293 = vmatpush1.msra.mxu0 0.0
    %294 = vmatprep.subr.mxu0 0.0
    %295 = vmatpush1.msra.mxu0 0.0
    %296 = vmatprep.subr.mxu0 0.0
    %297 = vmatpush1.msra.mxu0 0.0
    %298 = vmatprep.subr.mxu0 0.0
    %299 = vmatpush1.msra.mxu0 0.0
    %300 = vmatprep.subr.mxu0 0.0
    %301 = vmatpush1.msra.mxu0 0.0
    %302 = vmatprep.subr.mxu0 0.0
    %303 = vmatpush1.msra.mxu0 0.0
    %304 = vmatprep.subr.mxu0 0.0
    %305 = vmatpush1.msra.mxu0 0.0
    %306 = vmatprep.subr.mxu0 0.0
    %307 = vmatpush1.msra.mxu0 0.0
    %308 = vmatprep.subr.mxu0 0.0
    %309 = vmatpush1.msra.mxu0 0.0
    %310 = vmatprep.subr.mxu0 0.0
    %311 = vmatpush1.msra.mxu0 0.0
    %312 = vmatprep.subr.mxu0 0.0
    %313 = vmatpush1.msra.mxu0 0.0
    %314 = vmatprep.subr.mxu0 0.0
    %315 = vmatpush1.msra.mxu0 0.0
    %316 = vmatprep.subr.mxu0 0.0
    %317 = vmatpush1.msra.mxu0 0.0
    %318 = vmatprep.subr.mxu0 0.0
    %319 = vmatpush1.msra.mxu0 0.0
    %320 = vmatprep.subr.mxu0 0.0
    %321 = vmatpush1.msra.mxu0 0.0
    %322 = vmatprep.subr.mxu0 0.0
    %323 = vmatpush1.msra.mxu0 0.0
    %324 = vmatprep.subr.mxu0 0.0
    %325 = vmatpush1.msra.mxu0 0.0
    %326 = vmatprep.subr.mxu0 0.0
    %327 = vmatpush1.msra.mxu0 0.0
    %328 = vmatprep.subr.mxu0 0.0
    %329 = vmatpush1.msra.mxu0 0.0
    %330 = vmatprep.subr.mxu0 0.0
    %331 = vmatpush1.msra.mxu0 0.0
    %332 = vmatprep.subr.mxu0 0.0
    %333 = vmatpush1.msra.mxu0 0.0
    %334 = vmatprep.subr.mxu0 0.0
    %335 = vmatpush1.msra.mxu0 0.0
    %336 = vmatprep.subr.mxu0 0.0
    %337 = vmatpush1.msra.mxu0 0.0
    %338 = vmatprep.subr.mxu0 0.0
    %339 = vmatpush1.msra.mxu0 0.0
    %340 = vmatprep.subr.mxu0 0.0
    %341 = vmatpush1.msra.mxu0 0.0
    %342 = vmatprep.subr.mxu0 0.0
    %343 = vmatpush1.msra.mxu0 0.0
    %344 = vmatprep.mubr.f32.mxu0 0.0
    %345 = vmatmul.mubr.f32.gmra.mrb[0].mxu0 %v269
    %v346 = vpop.f32.mrb[0].mxu0
    %v347 = vadd.f32 %v265, %v346
    %v348 = vpop.f32.mrb[0].mxu0
    %349 = vmatprep.mubr.f32.mxu0 0.0
    %350 = vmatmul.mubr.f32.gmra.mrb[0].mxu0 %v272
    %v351 = vpop.f32.mrb[0].mxu0
    %v352 = vadd.f32 %v265, %v351
    %v353 = vpop.f32.mrb[0].mxu0
    %354 = vmatprep.mubr.f32.mxu0 0.0
    %355 = vmatmul.mubr.f32.gmra.mrb[0].mxu0 %v275
    %v356 = vpop.f32.mrb[0].mxu0
    %v357 = vadd.f32 %v265, %v356
    %v358 = vpop.f32.mrb[0].mxu0
    %359 = vmatprep.mubr.f32.mxu0 0.0
    %360 = vmatmul.mubr.f32.gmra.mrb[0].mxu0 %v278
    %v361 = vpop.f32.mrb[0].mxu0
    %v362 = vadd.f32 %v265, %v361
    %v363 = vpop.f32.mrb[0].mxu0
    %364 = vdwg.mxu0
    %v365 = vmax.f32 %v347, 0.0
    %v366 = vmax.f32 %v352, 0.0
    %v367 = vmax.f32 %v357, 0.0
    %v368 = vmax.f32 %v362, 0.0
    %v369 = vld [vmem:[#allocation8] sm:$0xff]
    %v370 = vld [vmem:[#allocation8 + $0x8] sm:$0xff]
    %v371 = vld [vmem:[#allocation8 + $0x10] sm:$0xff]
    %v372 = vld [vmem:[#allocation8 + $0x18] sm:$0xff]
    %v373 = vld [vmem:[%s9] sm:$0x1]
    %v375 = vlaneseq
    %v376 = vshrl.u32 %v375, 7
    %v377 = vsub.s32 0, %v376
    %v378 = vrot.slane %v373, %v377
    %v381 = vsel %vm267, %v365, 0
    %v384 = vsel %vm267, %v366, 0
    %v387 = vsel %vm267, %v367, 0
    %v390 = vsel %vm267, %v368, 0
    %392 = vmatprep.subr.mxu0 0.0
    %393 = vmatpush1.msra.mxu0 %v369
    %394 = vmatprep.subr.mxu0 0.0
    %395 = vmatpush1.msra.mxu0 %v370
    %396 = vmatprep.subr.mxu0 0.0
    %397 = vmatpush1.msra.mxu0 %v371
    %398 = vmatprep.subr.mxu0 0.0
    %399 = vmatpush1.msra.mxu0 %v372
    %400 = vmatprep.subr.mxu0 0.0
    %401 = vmatpush1.msra.mxu0 0.0
    %402 = vmatprep.subr.mxu0 0.0
    %403 = vmatpush1.msra.mxu0 0.0
    %404 = vmatprep.subr.mxu0 0.0
    %405 = vmatpush1.msra.mxu0 0.0
    %406 = vmatprep.subr.mxu0 0.0
    %407 = vmatpush1.msra.mxu0 0.0
    %408 = vmatprep.subr.mxu0 0.0
    %409 = vmatpush1.msra.mxu0 0.0
    %410 = vmatprep.subr.mxu0 0.0
    %411 = vmatpush1.msra.mxu0 0.0
    %412 = vmatprep.subr.mxu0 0.0
    %413 = vmatpush1.msra.mxu0 0.0
    %414 = vmatprep.subr.mxu0 0.0
    %415 = vmatpush1.msra.mxu0 0.0
    %416 = vmatprep.subr.mxu0 0.0
    %417 = vmatpush1.msra.mxu0 0.0
    %418 = vmatprep.subr.mxu0 0.0
    %419 = vmatpush1.msra.mxu0 0.0
    %420 = vmatprep.subr.mxu0 0.0
    %421 = vmatpush1.msra.mxu0 0.0
    %422 = vmatprep.subr.mxu0 0.0
    %423 = vmatpush1.msra.mxu0 0.0
    %424 = vmatprep.subr.mxu0 0.0
    %425 = vmatpush1.msra.mxu0 0.0
    %426 = vmatprep.subr.mxu0 0.0
    %427 = vmatpush1.msra.mxu0 0.0
    %428 = vmatprep.subr.mxu0 0.0
    %429 = vmatpush1.msra.mxu0 0.0
    %430 = vmatprep.subr.mxu0 0.0
    %431 = vmatpush1.msra.mxu0 0.0
    %432 = vmatprep.subr.mxu0 0.0
    %433 = vmatpush1.msra.mxu0 0.0
    %434 = vmatprep.subr.mxu0 0.0
    %435 = vmatpush1.msra.mxu0 0.0
    %436 = vmatprep.subr.mxu0 0.0
    %437 = vmatpush1.msra.mxu0 0.0
    %438 = vmatprep.subr.mxu0 0.0
    %439 = vmatpush1.msra.mxu0 0.0
    %440 = vmatprep.subr.mxu0 0.0
    %441 = vmatpush1.msra.mxu0 0.0
    %442 = vmatprep.subr.mxu0 0.0
    %443 = vmatpush1.msra.mxu0 0.0
    %444 = vmatprep.subr.mxu0 0.0
    %445 = vmatpush1.msra.mxu0 0.0
    %446 = vmatprep.subr.mxu0 0.0
    %447 = vmatpush1.msra.mxu0 0.0
    %448 = vmatprep.subr.mxu0 0.0
    %449 = vmatpush1.msra.mxu0 0.0
    %450 = vmatprep.subr.mxu0 0.0
    %451 = vmatpush1.msra.mxu0 0.0
    %452 = vmatprep.subr.mxu0 0.0
    %453 = vmatpush1.msra.mxu0 0.0
    %454 = vmatprep.subr.mxu0 0.0
    %455 = vmatpush1.msra.mxu0 0.0
    %456 = vmatprep.mubr.f32.mxu0 0.0
    %457 = vmatmul.mubr.f32.gmra.mrb[0].mxu0 %v381
    %v458 = vpop.f32.mrb[0].mxu0
    %v459 = vadd.f32 %v378, %v458
    %v460 = vpop.f32.mrb[0].mxu0
    %461 = vmatprep.mubr.f32.mxu0 0.0
    %462 = vmatmul.mubr.f32.gmra.mrb[0].mxu0 %v384
    %v463 = vpop.f32.mrb[0].mxu0
    %v464 = vadd.f32 %v378, %v463
    %v465 = vpop.f32.mrb[0].mxu0
    %466 = vmatprep.mubr.f32.mxu0 0.0
    %467 = vmatmul.mubr.f32.gmra.mrb[0].mxu0 %v387
    %v468 = vpop.f32.mrb[0].mxu0
    %v469 = vadd.f32 %v378, %v468
    %v470 = vpop.f32.mrb[0].mxu0
    %471 = vmatprep.mubr.f32.mxu0 0.0
    %472 = vmatmul.mubr.f32.gmra.mrb[0].mxu0 %v390
    %v473 = vpop.f32.mrb[0].mxu0
    %v474 = vadd.f32 %v378, %v473
    %v475 = vpop.f32.mrb[0].mxu0
    %476 = vdwg.mxu0
    %v477 = vld [vmem:[#allocation9] sm:$0xff]
    %v478 = vld [vmem:[#allocation9 + $0x8] sm:$0xff]
    %v479 = vld [vmem:[#allocation9 + $0x10] sm:$0xff]
    %v480 = vld [vmem:[#allocation9 + $0x18] sm:$0xff]
    %v481 = vld [vmem:[%s1] sm:$0xf]
    %v482 = vld [vmem:[%s2] sm:$0xf]
    %v484 = vsel %vm267, %v481, 0
    %486 = vmatprep.subr.mxu0 0.0
    %487 = vmatpush1.msra.mxu0 %v477
    %488 = vmatprep.subr.mxu0 0.0
    %489 = vmatpush1.msra.mxu0 %v478
    %490 = vmatprep.subr.mxu0 0.0
    %491 = vmatpush1.msra.mxu0 %v479
    %492 = vmatprep.subr.mxu0 0.0
    %493 = vmatpush1.msra.mxu0 %v480
    %494 = vmatprep.subr.mxu0 0.0
    %495 = vmatpush1.msra.mxu0 0.0
    %496 = vmatprep.subr.mxu0 0.0
    %497 = vmatpush1.msra.mxu0 0.0
    %498 = vmatprep.subr.mxu0 0.0
    %499 = vmatpush1.msra.mxu0 0.0
    %500 = vmatprep.subr.mxu0 0.0
    %501 = vmatpush1.msra.mxu0 0.0
    %502 = vmatprep.subr.mxu0 0.0
    %503 = vmatpush1.msra.mxu0 0.0
    %504 = vmatprep.subr.mxu0 0.0
    %505 = vmatpush1.msra.mxu0 0.0
    %506 = vmatprep.subr.mxu0 0.0
    %507 = vmatpush1.msra.mxu0 0.0
    %508 = vmatprep.subr.mxu0 0.0
    %509 = vmatpush1.msra.mxu0 0.0
    %510 = vmatprep.subr.mxu0 0.0
    %511 = vmatpush1.msra.mxu0 0.0
    %512 = vmatprep.subr.mxu0 0.0
    %513 = vmatpush1.msra.mxu0 0.0
    %514 = vmatprep.subr.mxu0 0.0
    %515 = vmatpush1.msra.mxu0 0.0
    %516 = vmatprep.subr.mxu0 0.0
    %517 = vmatpush1.msra.mxu0 0.0
    %518 = vmatprep.subr.mxu0 0.0
    %519 = vmatpush1.msra.mxu0 0.0
    %520 = vmatprep.subr.mxu0 0.0
    %521 = vmatpush1.msra.mxu0 0.0
    %522 = vmatprep.subr.mxu0 0.0
    %523 = vmatpush1.msra.mxu0 0.0
    %524 = vmatprep.subr.mxu0 0.0
    %525 = vmatpush1.msra.mxu0 0.0
    %526 = vmatprep.subr.mxu0 0.0
    %527 = vmatpush1.msra.mxu0 0.0
    %528 = vmatprep.subr.mxu0 0.0
    %529 = vmatpush1.msra.mxu0 0.0
    %530 = vmatprep.subr.mxu0 0.0
    %531 = vmatpush1.msra.mxu0 0.0
    %532 = vmatprep.subr.mxu0 0.0
    %533 = vmatpush1.msra.mxu0 0.0
    %534 = vmatprep.subr.mxu0 0.0
    %535 = vmatpush1.msra.mxu0 0.0
    %536 = vmatprep.subr.mxu0 0.0
    %537 = vmatpush1.msra.mxu0 0.0
    %538 = vmatprep.subr.mxu0 0.0
    %539 = vmatpush1.msra.mxu0 0.0
    %540 = vmatprep.subr.mxu0 0.0
    %541 = vmatpush1.msra.mxu0 0.0
    %542 = vmatprep.subr.mxu0 0.0
    %543 = vmatpush1.msra.mxu0 0.0
    %544 = vmatprep.subr.mxu0 0.0
    %545 = vmatpush1.msra.mxu0 0.0
    %546 = vmatprep.subr.mxu0 0.0
    %547 = vmatpush1.msra.mxu0 0.0
    %548 = vmatprep.subr.mxu0 0.0
    %549 = vmatpush1.msra.mxu0 0.0
    %550 = vmatprep.mubr.f32.mxu0 0.0
    %551 = vmatmul.mubr.f32.gmra.mrb[0].mxu0 %v484
    %v552 = vpop.f32.mrb[0].mxu0
    %v553 = vadd.f32 0.0, %v552
    %v554 = vpop.f32.mrb[0].mxu0
    %555 = vdwg.mxu0
    %v556 = vadd.f32 %v459, %v553
    %v557 = vxor.u32 %v556, 2147483648
    %v558 = vmul.f32 %v557, 1.442695
    %v559 = vpow.pop %v558
    %v560 = vadd.f32 %v559, 1.0
    %v561 = vrcp.pop %v560
    %v562 = vmul.f32 1.0, %v561
    %v563 = vtanh.pop %v556
    %565 = vrot.lane.b32.xlu0 %v482, 32
    %v566 = vpop.permute.xlu0 %565
    %v568 = vmul.f32 %v562, %v566
    %570 = vrot.lane.b32.xlu0 %v563, 64
    %v571 = vpop.permute.xlu0 %570
    %v573 = vmul.f32 %v562, %v571
    %575 = vrot.lane.b32.xlu0 %v573, 32
    %v576 = vpop.permute.xlu0 %575
    %v578 = vadd.f32 %v568, %v576
    %v579 = vtanh.pop %v578
    %581 = vrot.lane.b32.xlu0 %v579, 64
    %v582 = vpop.permute.xlu0 %581
    %v584 = vmul.f32 %v562, %v582
    %586 = vrot.lane.b32.xlu0 %v584, 32
    %v587 = vpop.permute.xlu0 %586
    %vm589 = vcmask 257024
    %590 = vst.msk [vmem:[#allocation2] sm:$0xf] %vm589, %v587
    %v591 = vsel %vm267, %v587, 0
    %593 = vmatprep.subr.mxu0 0.0
    %594 = vmatpush1.msra.mxu0 %v477
    %595 = vmatprep.subr.mxu0 0.0
    %596 = vmatpush1.msra.mxu0 %v478
    %597 = vmatprep.subr.mxu0 0.0
    %598 = vmatpush1.msra.mxu0 %v479
    %599 = vmatprep.subr.mxu0 0.0
    %600 = vmatpush1.msra.mxu0 %v480
    %601 = vmatprep.subr.mxu0 0.0
    %602 = vmatpush1.msra.mxu0 0.0
    %603 = vmatprep.subr.mxu0 0.0
    %604 = vmatpush1.msra.mxu0 0.0
    %605 = vmatprep.subr.mxu0 0.0
    %606 = vmatpush1.msra.mxu0 0.0
    %607 = vmatprep.subr.mxu0 0.0
    %608 = vmatpush1.msra.mxu0 0.0
    %609 = vmatprep.subr.mxu0 0.0
    %610 = vmatpush1.msra.mxu0 0.0
    %611 = vmatprep.subr.mxu0 0.0
    %612 = vmatpush1.msra.mxu0 0.0
    %613 = vmatprep.subr.mxu0 0.0
    %614 = vmatpush1.msra.mxu0 0.0
    %615 = vmatprep.subr.mxu0 0.0
    %616 = vmatpush1.msra.mxu0 0.0
    %617 = vmatprep.subr.mxu0 0.0
    %618 = vmatpush1.msra.mxu0 0.0
    %619 = vmatprep.subr.mxu0 0.0
    %620 = vmatpush1.msra.mxu0 0.0
    %621 = vmatprep.subr.mxu0 0.0
    %622 = vmatpush1.msra.mxu0 0.0
    %623 = vmatprep.subr.mxu0 0.0
    %624 = vmatpush1.msra.mxu0 0.0
    %625 = vmatprep.subr.mxu0 0.0
    %626 = vmatpush1.msra.mxu0 0.0
    %627 = vmatprep.subr.mxu0 0.0
    %628 = vmatpush1.msra.mxu0 0.0
    %629 = vmatprep.subr.mxu0 0.0
    %630 = vmatpush1.msra.mxu0 0.0
    %631 = vmatprep.subr.mxu0 0.0
    %632 = vmatpush1.msra.mxu0 0.0
    %633 = vmatprep.subr.mxu0 0.0
    %634 = vmatpush1.msra.mxu0 0.0
    %635 = vmatprep.subr.mxu0 0.0
    %636 = vmatpush1.msra.mxu0 0.0
    %637 = vmatprep.subr.mxu0 0.0
    %638 = vmatpush1.msra.mxu0 0.0
    %639 = vmatprep.subr.mxu0 0.0
    %640 = vmatpush1.msra.mxu0 0.0
    %641 = vmatprep.subr.mxu0 0.0
    %642 = vmatpush1.msra.mxu0 0.0
    %643 = vmatprep.subr.mxu0 0.0
    %644 = vmatpush1.msra.mxu0 0.0
    %645 = vmatprep.subr.mxu0 0.0
    %646 = vmatpush1.msra.mxu0 0.0
    %647 = vmatprep.subr.mxu0 0.0
    %648 = vmatpush1.msra.mxu0 0.0
    %649 = vmatprep.subr.mxu0 0.0
    %650 = vmatpush1.msra.mxu0 0.0
    %651 = vmatprep.subr.mxu0 0.0
    %652 = vmatpush1.msra.mxu0 0.0
    %653 = vmatprep.subr.mxu0 0.0
    %654 = vmatpush1.msra.mxu0 0.0
    %655 = vmatprep.subr.mxu0 0.0
    %656 = vmatpush1.msra.mxu0 0.0
    %657 = vmatprep.mubr.f32.mxu0 0.0
    %658 = vmatmul.mubr.f32.gmra.mrb[0].mxu0 %v591
    %v659 = vpop.f32.mrb[0].mxu0
    %v660 = vadd.f32 0.0, %v659
    %v661 = vpop.f32.mrb[0].mxu0
    %662 = vdwg.mxu0
    %v664 = vrot.slane %v660, 4
    %v666 = vadd.f32 %v459, %v664
    %v667 = vxor.u32 %v666, 2147483648
    %v668 = vmul.f32 %v667, 1.442695
    %v669 = vpow.pop %v668
    %v670 = vadd.f32 %v669, 1.0
    %v671 = vrcp.pop %v670
    %v672 = vmul.f32 1.0, %v671
    %v673 = vtanh.pop %v666
    %v675 = vrot.slane %v578, 4
    %v677 = vmul.f32 %v672, %v675
    %679 = vrot.lane.b32.xlu0 %v673, 64
    %v680 = vpop.permute.xlu0 %679
    %v682 = vmul.f32 %v672, %v680
    %684 = vrot.lane.b32.xlu0 %v682, 32
    %v685 = vpop.permute.xlu0 %684
    %v687 = vadd.f32 %v677, %v685
    %v688 = vtanh.pop %v687
    %690 = vrot.lane.b32.xlu0 %v688, 64
    %v691 = vpop.permute.xlu0 %690
    %v693 = vmul.f32 %v672, %v691
    %695 = vrot.lane.b32.xlu0 %v693, 32
    %v696 = vpop.permute.xlu0 %695
    %vm698 = vcmask 261124
    %699 = vst.msk [vmem:[#allocation2] sm:$0xf0] %vm698, %v696
    %v700 = vrot.slane %v693, 4
    %701 = vrot.lane.b32.xlu0 %v700, 32
    %v702 = vpop.permute.xlu0 %701
    %v703 = vsel %vm267, %v702, 0
    %705 = vmatprep.subr.mxu0 0.0
    %706 = vmatpush1.msra.mxu0 %v477
    %707 = vmatprep.subr.mxu0 0.0
    %708 = vmatpush1.msra.mxu0 %v478
    %709 = vmatprep.subr.mxu0 0.0
    %710 = vmatpush1.msra.mxu0 %v479
    %711 = vmatprep.subr.mxu0 0.0
    %712 = vmatpush1.msra.mxu0 %v480
    %713 = vmatprep.subr.mxu0 0.0
    %714 = vmatpush1.msra.mxu0 0.0
    %715 = vmatprep.subr.mxu0 0.0
    %716 = vmatpush1.msra.mxu0 0.0
    %717 = vmatprep.subr.mxu0 0.0
    %718 = vmatpush1.msra.mxu0 0.0
    %719 = vmatprep.subr.mxu0 0.0
    %720 = vmatpush1.msra.mxu0 0.0
    %721 = vmatprep.subr.mxu0 0.0
    %722 = vmatpush1.msra.mxu0 0.0
    %723 = vmatprep.subr.mxu0 0.0
    %724 = vmatpush1.msra.mxu0 0.0
    %725 = vmatprep.subr.mxu0 0.0
    %726 = vmatpush1.msra.mxu0 0.0
    %727 = vmatprep.subr.mxu0 0.0
    %728 = vmatpush1.msra.mxu0 0.0
    %729 = vmatprep.subr.mxu0 0.0
    %730 = vmatpush1.msra.mxu0 0.0
    %731 = vmatprep.subr.mxu0 0.0
    %732 = vmatpush1.msra.mxu0 0.0
    %733 = vmatprep.subr.mxu0 0.0
    %734 = vmatpush1.msra.mxu0 0.0
    %735 = vmatprep.subr.mxu0 0.0
    %736 = vmatpush1.msra.mxu0 0.0
    %737 = vmatprep.subr.mxu0 0.0
    %738 = vmatpush1.msra.mxu0 0.0
    %739 = vmatprep.subr.mxu0 0.0
    %740 = vmatpush1.msra.mxu0 0.0
    %741 = vmatprep.subr.mxu0 0.0
    %742 = vmatpush1.msra.mxu0 0.0
    %743 = vmatprep.subr.mxu0 0.0
    %744 = vmatpush1.msra.mxu0 0.0
    %745 = vmatprep.subr.mxu0 0.0
    %746 = vmatpush1.msra.mxu0 0.0
    %747 = vmatprep.subr.mxu0 0.0
    %748 = vmatpush1.msra.mxu0 0.0
    %749 = vmatprep.subr.mxu0 0.0
    %750 = vmatpush1.msra.mxu0 0.0
    %751 = vmatprep.subr.mxu0 0.0
    %752 = vmatpush1.msra.mxu0 0.0
    %753 = vmatprep.subr.mxu0 0.0
    %754 = vmatpush1.msra.mxu0 0.0
    %755 = vmatprep.subr.mxu0 0.0
    %756 = vmatpush1.msra.mxu0 0.0
    %757 = vmatprep.subr.mxu0 0.0
    %758 = vmatpush1.msra.mxu0 0.0
    %759 = vmatprep.subr.mxu0 0.0
    %760 = vmatpush1.msra.mxu0 0.0
    %761 = vmatprep.subr.mxu0 0.0
    %762 = vmatpush1.msra.mxu0 0.0
    %763 = vmatprep.subr.mxu0 0.0
    %764 = vmatpush1.msra.mxu0 0.0
    %765 = vmatprep.subr.mxu0 0.0
    %766 = vmatpush1.msra.mxu0 0.0
    %767 = vmatprep.subr.mxu0 0.0
    %768 = vmatpush1.msra.mxu0 0.0
    %769 = vmatprep.mubr.f32.mxu0 0.0
    %770 = vmatmul.mubr.f32.gmra.mrb[0].mxu0 %v703
    %v771 = vpop.f32.mrb[0].mxu0
    %v772 = vadd.f32 0.0, %v771
    %v773 = vpop.f32.mrb[0].mxu0
    %774 = vdwg.mxu0
    %v775 = vadd.f32 %v464, %v772
    %v776 = vxor.u32 %v775, 2147483648
    %v777 = vmul.f32 %v776, 1.442695
    %v778 = vpow.pop %v777
    %v779 = vadd.f32 %v778, 1.0
    %v780 = vrcp.pop %v779
    %v781 = vmul.f32 1.0, %v780
    %v782 = vtanh.pop %v775
    %v784 = vrot.slane %v687, 4
    %v786 = vmul.f32 %v781, %v784
    %788 = vrot.lane.b32.xlu0 %v782, 64
    %v789 = vpop.permute.xlu0 %788
    %v791 = vmul.f32 %v781, %v789
    %793 = vrot.lane.b32.xlu0 %v791, 32
    %v794 = vpop.permute.xlu0 %793
    %v796 = vadd.f32 %v786, %v794
    %v797 = vtanh.pop %v796
    %799 = vrot.lane.b32.xlu0 %v797, 64
    %v800 = vpop.permute.xlu0 %799
    %v802 = vmul.f32 %v781, %v800
    %804 = vrot.lane.b32.xlu0 %v802, 32
    %v805 = vpop.permute.xlu0 %804
    %807 = vst.msk [vmem:[#allocation2 + $0x8] sm:$0xf] %vm589, %v805
    %v808 = vsel %vm267, %v805, 0
    %810 = vmatprep.subr.mxu0 0.0
    %811 = vmatpush1.msra.mxu0 %v477
    %812 = vmatprep.subr.mxu0 0.0
    %813 = vmatpush1.msra.mxu0 %v478
    %814 = vmatprep.subr.mxu0 0.0
    %815 = vmatpush1.msra.mxu0 %v479
    %816 = vmatprep.subr.mxu0 0.0
    %817 = vmatpush1.msra.mxu0 %v480
    %818 = vmatprep.subr.mxu0 0.0
    %819 = vmatpush1.msra.mxu0 0.0
    %820 = vmatprep.subr.mxu0 0.0
    %821 = vmatpush1.msra.mxu0 0.0
    %822 = vmatprep.subr.mxu0 0.0
    %823 = vmatpush1.msra.mxu0 0.0
    %824 = vmatprep.subr.mxu0 0.0
    %825 = vmatpush1.msra.mxu0 0.0
    %826 = vmatprep.subr.mxu0 0.0
    %827 = vmatpush1.msra.mxu0 0.0
    %828 = vmatprep.subr.mxu0 0.0
    %829 = vmatpush1.msra.mxu0 0.0
    %830 = vmatprep.subr.mxu0 0.0
    %831 = vmatpush1.msra.mxu0 0.0
    %832 = vmatprep.subr.mxu0 0.0
    %833 = vmatpush1.msra.mxu0 0.0
    %834 = vmatprep.subr.mxu0 0.0
    %835 = vmatpush1.msra.mxu0 0.0
    %836 = vmatprep.subr.mxu0 0.0
    %837 = vmatpush1.msra.mxu0 0.0
    %838 = vmatprep.subr.mxu0 0.0
    %839 = vmatpush1.msra.mxu0 0.0
    %840 = vmatprep.subr.mxu0 0.0
    %841 = vmatpush1.msra.mxu0 0.0
    %842 = vmatprep.subr.mxu0 0.0
    %843 = vmatpush1.msra.mxu0 0.0
    %844 = vmatprep.subr.mxu0 0.0
    %845 = vmatpush1.msra.mxu0 0.0
    %846 = vmatprep.subr.mxu0 0.0
    %847 = vmatpush1.msra.mxu0 0.0
    %848 = vmatprep.subr.mxu0 0.0
    %849 = vmatpush1.msra.mxu0 0.0
    %850 = vmatprep.subr.mxu0 0.0
    %851 = vmatpush1.msra.mxu0 0.0
    %852 = vmatprep.subr.mxu0 0.0
    %853 = vmatpush1.msra.mxu0 0.0
    %854 = vmatprep.subr.mxu0 0.0
    %855 = vmatpush1.msra.mxu0 0.0
    %856 = vmatprep.subr.mxu0 0.0
    %857 = vmatpush1.msra.mxu0 0.0
    %858 = vmatprep.subr.mxu0 0.0
    %859 = vmatpush1.msra.mxu0 0.0
    %860 = vmatprep.subr.mxu0 0.0
    %861 = vmatpush1.msra.mxu0 0.0
    %862 = vmatprep.subr.mxu0 0.0
    %863 = vmatpush1.msra.mxu0 0.0
    %864 = vmatprep.subr.mxu0 0.0
    %865 = vmatpush1.msra.mxu0 0.0
    %866 = vmatprep.subr.mxu0 0.0
    %867 = vmatpush1.msra.mxu0 0.0
    %868 = vmatprep.subr.mxu0 0.0
    %869 = vmatpush1.msra.mxu0 0.0
    %870 = vmatprep.subr.mxu0 0.0
    %871 = vmatpush1.msra.mxu0 0.0
    %872 = vmatprep.subr.mxu0 0.0
    %873 = vmatpush1.msra.mxu0 0.0
    %874 = vmatprep.mubr.f32.mxu0 0.0
    %875 = vmatmul.mubr.f32.gmra.mrb[0].mxu0 %v808
    %v876 = vpop.f32.mrb[0].mxu0
    %v877 = vadd.f32 0.0, %v876
    %v878 = vpop.f32.mrb[0].mxu0
    %879 = vdwg.mxu0
    %v881 = vrot.slane %v877, 4
    %v883 = vadd.f32 %v464, %v881
    %v884 = vxor.u32 %v883, 2147483648
    %v885 = vmul.f32 %v884, 1.442695
    %v886 = vpow.pop %v885
    %v887 = vadd.f32 %v886, 1.0
    %v888 = vrcp.pop %v887
    %v889 = vmul.f32 1.0, %v888
    %v890 = vtanh.pop %v883
    %v892 = vrot.slane %v796, 4
    %v894 = vmul.f32 %v889, %v892
    %896 = vrot.lane.b32.xlu0 %v890, 64
    %v897 = vpop.permute.xlu0 %896
    %v899 = vmul.f32 %v889, %v897
    %901 = vrot.lane.b32.xlu0 %v899, 32
    %v902 = vpop.permute.xlu0 %901
    %v904 = vadd.f32 %v894, %v902
    %v905 = vtanh.pop %v904
    %907 = vrot.lane.b32.xlu0 %v905, 64
    %v908 = vpop.permute.xlu0 %907
    %v910 = vmul.f32 %v889, %v908
    %912 = vrot.lane.b32.xlu0 %v910, 32
    %v913 = vpop.permute.xlu0 %912
    %915 = vst.msk [vmem:[#allocation2 + $0x8] sm:$0xf0] %vm698, %v913
    %v916 = vrot.slane %v910, 4
    %917 = vrot.lane.b32.xlu0 %v916, 32
    %v918 = vpop.permute.xlu0 %917
    %v919 = vsel %vm267, %v918, 0
    %921 = vmatprep.subr.mxu0 0.0
    %922 = vmatpush1.msra.mxu0 %v477
    %923 = vmatprep.subr.mxu0 0.0
    %924 = vmatpush1.msra.mxu0 %v478
    %925 = vmatprep.subr.mxu0 0.0
    %926 = vmatpush1.msra.mxu0 %v479
    %927 = vmatprep.subr.mxu0 0.0
    %928 = vmatpush1.msra.mxu0 %v480
    %929 = vmatprep.subr.mxu0 0.0
    %930 = vmatpush1.msra.mxu0 0.0
    %931 = vmatprep.subr.mxu0 0.0
    %932 = vmatpush1.msra.mxu0 0.0
    %933 = vmatprep.subr.mxu0 0.0
    %934 = vmatpush1.msra.mxu0 0.0
    %935 = vmatprep.subr.mxu0 0.0
    %936 = vmatpush1.msra.mxu0 0.0
    %937 = vmatprep.subr.mxu0 0.0
    %938 = vmatpush1.msra.mxu0 0.0
    %939 = vmatprep.subr.mxu0 0.0
    %940 = vmatpush1.msra.mxu0 0.0
    %941 = vmatprep.subr.mxu0 0.0
    %942 = vmatpush1.msra.mxu0 0.0
    %943 = vmatprep.subr.mxu0 0.0
    %944 = vmatpush1.msra.mxu0 0.0
    %945 = vmatprep.subr.mxu0 0.0
    %946 = vmatpush1.msra.mxu0 0.0
    %947 = vmatprep.subr.mxu0 0.0
    %948 = vmatpush1.msra.mxu0 0.0
    %949 = vmatprep.subr.mxu0 0.0
    %950 = vmatpush1.msra.mxu0 0.0
    %951 = vmatprep.subr.mxu0 0.0
    %952 = vmatpush1.msra.mxu0 0.0
    %953 = vmatprep.subr.mxu0 0.0
    %954 = vmatpush1.msra.mxu0 0.0
    %955 = vmatprep.subr.mxu0 0.0
    %956 = vmatpush1.msra.mxu0 0.0
    %957 = vmatprep.subr.mxu0 0.0
    %958 = vmatpush1.msra.mxu0 0.0
    %959 = vmatprep.subr.mxu0 0.0
    %960 = vmatpush1.msra.mxu0 0.0
    %961 = vmatprep.subr.mxu0 0.0
    %962 = vmatpush1.msra.mxu0 0.0
    %963 = vmatprep.subr.mxu0 0.0
    %964 = vmatpush1.msra.mxu0 0.0
    %965 = vmatprep.subr.mxu0 0.0
    %966 = vmatpush1.msra.mxu0 0.0
    %967 = vmatprep.subr.mxu0 0.0
    %968 = vmatpush1.msra.mxu0 0.0
    %969 = vmatprep.subr.mxu0 0.0
    %970 = vmatpush1.msra.mxu0 0.0
    %971 = vmatprep.subr.mxu0 0.0
    %972 = vmatpush1.msra.mxu0 0.0
    %973 = vmatprep.subr.mxu0 0.0
    %974 = vmatpush1.msra.mxu0 0.0
    %975 = vmatprep.subr.mxu0 0.0
    %976 = vmatpush1.msra.mxu0 0.0
    %977 = vmatprep.subr.mxu0 0.0
    %978 = vmatpush1.msra.mxu0 0.0
    %979 = vmatprep.subr.mxu0 0.0
    %980 = vmatpush1.msra.mxu0 0.0
    %981 = vmatprep.subr.mxu0 0.0
    %982 = vmatpush1.msra.mxu0 0.0
    %983 = vmatprep.subr.mxu0 0.0
    %984 = vmatpush1.msra.mxu0 0.0
    %985 = vmatprep.mubr.f32.mxu0 0.0
    %986 = vmatmul.mubr.f32.gmra.mrb[0].mxu0 %v919
    %v987 = vpop.f32.mrb[0].mxu0
    %v988 = vadd.f32 0.0, %v987
    %v989 = vpop.f32.mrb[0].mxu0
    %990 = vdwg.mxu0
    %v991 = vadd.f32 %v469, %v988
    %v992 = vxor.u32 %v991, 2147483648
    %v993 = vmul.f32 %v992, 1.442695
    %v994 = vpow.pop %v993
    %v995 = vadd.f32 %v994, 1.0
    %v996 = vrcp.pop %v995
    %v997 = vmul.f32 1.0, %v996
    %v998 = vtanh.pop %v991
    %v1000 = vrot.slane %v904, 4
    %v1002 = vmul.f32 %v997, %v1000
    %1004 = vrot.lane.b32.xlu0 %v998, 64
    %v1005 = vpop.permute.xlu0 %1004
    %v1007 = vmul.f32 %v997, %v1005
    %1009 = vrot.lane.b32.xlu0 %v1007, 32
    %v1010 = vpop.permute.xlu0 %1009
    %v1012 = vadd.f32 %v1002, %v1010
    %v1013 = vtanh.pop %v1012
    %1015 = vrot.lane.b32.xlu0 %v1013, 64
    %v1016 = vpop.permute.xlu0 %1015
    %v1018 = vmul.f32 %v997, %v1016
    %1020 = vrot.lane.b32.xlu0 %v1018, 32
    %v1021 = vpop.permute.xlu0 %1020
    %1023 = vst.msk [vmem:[#allocation2 + $0x10] sm:$0xf] %vm589, %v1021
    %v1024 = vsel %vm267, %v1021, 0
    %1026 = vmatprep.subr.mxu0 0.0
    %1027 = vmatpush1.msra.mxu0 %v477
    %1028 = vmatprep.subr.mxu0 0.0
    %1029 = vmatpush1.msra.mxu0 %v478
    %1030 = vmatprep.subr.mxu0 0.0
    %1031 = vmatpush1.msra.mxu0 %v479
    %1032 = vmatprep.subr.mxu0 0.0
    %1033 = vmatpush1.msra.mxu0 %v480
    %1034 = vmatprep.subr.mxu0 0.0
    %1035 = vmatpush1.msra.mxu0 0.0
    %1036 = vmatprep.subr.mxu0 0.0
    %1037 = vmatpush1.msra.mxu0 0.0
    %1038 = vmatprep.subr.mxu0 0.0
    %1039 = vmatpush1.msra.mxu0 0.0
    %1040 = vmatprep.subr.mxu0 0.0
    %1041 = vmatpush1.msra.mxu0 0.0
    %1042 = vmatprep.subr.mxu0 0.0
    %1043 = vmatpush1.msra.mxu0 0.0
    %1044 = vmatprep.subr.mxu0 0.0
    %1045 = vmatpush1.msra.mxu0 0.0
    %1046 = vmatprep.subr.mxu0 0.0
    %1047 = vmatpush1.msra.mxu0 0.0
    %1048 = vmatprep.subr.mxu0 0.0
    %1049 = vmatpush1.msra.mxu0 0.0
    %1050 = vmatprep.subr.mxu0 0.0
    %1051 = vmatpush1.msra.mxu0 0.0
    %1052 = vmatprep.subr.mxu0 0.0
    %1053 = vmatpush1.msra.mxu0 0.0
    %1054 = vmatprep.subr.mxu0 0.0
    %1055 = vmatpush1.msra.mxu0 0.0
    %1056 = vmatprep.subr.mxu0 0.0
    %1057 = vmatpush1.msra.mxu0 0.0
    %1058 = vmatprep.subr.mxu0 0.0
    %1059 = vmatpush1.msra.mxu0 0.0
    %1060 = vmatprep.subr.mxu0 0.0
    %1061 = vmatpush1.msra.mxu0 0.0
    %1062 = vmatprep.subr.mxu0 0.0
    %1063 = vmatpush1.msra.mxu0 0.0
    %1064 = vmatprep.subr.mxu0 0.0
    %1065 = vmatpush1.msra.mxu0 0.0
    %1066 = vmatprep.subr.mxu0 0.0
    %1067 = vmatpush1.msra.mxu0 0.0
    %1068 = vmatprep.subr.mxu0 0.0
    %1069 = vmatpush1.msra.mxu0 0.0
    %1070 = vmatprep.subr.mxu0 0.0
    %1071 = vmatpush1.msra.mxu0 0.0
    %1072 = vmatprep.subr.mxu0 0.0
    %1073 = vmatpush1.msra.mxu0 0.0
    %1074 = vmatprep.subr.mxu0 0.0
    %1075 = vmatpush1.msra.mxu0 0.0
    %1076 = vmatprep.subr.mxu0 0.0
    %1077 = vmatpush1.msra.mxu0 0.0
    %1078 = vmatprep.subr.mxu0 0.0
    %1079 = vmatpush1.msra.mxu0 0.0
    %1080 = vmatprep.subr.mxu0 0.0
    %1081 = vmatpush1.msra.mxu0 0.0
    %1082 = vmatprep.subr.mxu0 0.0
    %1083 = vmatpush1.msra.mxu0 0.0
    %1084 = vmatprep.subr.mxu0 0.0
    %1085 = vmatpush1.msra.mxu0 0.0
    %1086 = vmatprep.subr.mxu0 0.0
    %1087 = vmatpush1.msra.mxu0 0.0
    %1088 = vmatprep.subr.mxu0 0.0
    %1089 = vmatpush1.msra.mxu0 0.0
    %1090 = vmatprep.mubr.f32.mxu0 0.0
    %1091 = vmatmul.mubr.f32.gmra.mrb[0].mxu0 %v1024
    %v1092 = vpop.f32.mrb[0].mxu0
    %v1093 = vadd.f32 0.0, %v1092
    %v1094 = vpop.f32.mrb[0].mxu0
    %1095 = vdwg.mxu0
    %v1097 = vrot.slane %v1093, 4
    %v1099 = vadd.f32 %v469, %v1097
    %v1100 = vxor.u32 %v1099, 2147483648
    %v1101 = vmul.f32 %v1100, 1.442695
    %v1102 = vpow.pop %v1101
    %v1103 = vadd.f32 %v1102, 1.0
    %v1104 = vrcp.pop %v1103
    %v1105 = vmul.f32 1.0, %v1104
    %v1106 = vtanh.pop %v1099
    %v1108 = vrot.slane %v1012, 4
    %v1110 = vmul.f32 %v1105, %v1108
    %1112 = vrot.lane.b32.xlu0 %v1106, 64
    %v1113 = vpop.permute.xlu0 %1112
    %v1115 = vmul.f32 %v1105, %v1113
    %1117 = vrot.lane.b32.xlu0 %v1115, 32
    %v1118 = vpop.permute.xlu0 %1117
    %v1120 = vadd.f32 %v1110, %v1118
    %v1121 = vtanh.pop %v1120
    %1123 = vrot.lane.b32.xlu0 %v1121, 64
    %v1124 = vpop.permute.xlu0 %1123
    %v1126 = vmul.f32 %v1105, %v1124
    %1128 = vrot.lane.b32.xlu0 %v1126, 32
    %v1129 = vpop.permute.xlu0 %1128
    %1131 = vst.msk [vmem:[#allocation2 + $0x10] sm:$0xf0] %vm698, %v1129
    %v1132 = vrot.slane %v1126, 4
    %1133 = vrot.lane.b32.xlu0 %v1132, 32
    %v1134 = vpop.permute.xlu0 %1133
    %v1135 = vsel %vm267, %v1134, 0
    %1137 = vmatprep.subr.mxu0 0.0
    %1138 = vmatpush1.msra.mxu0 %v477
    %1139 = vmatprep.subr.mxu0 0.0
    %1140 = vmatpush1.msra.mxu0 %v478
    %1141 = vmatprep.subr.mxu0 0.0
    %1142 = vmatpush1.msra.mxu0 %v479
    %1143 = vmatprep.subr.mxu0 0.0
    %1144 = vmatpush1.msra.mxu0 %v480
    %1145 = vmatprep.subr.mxu0 0.0
    %1146 = vmatpush1.msra.mxu0 0.0
    %1147 = vmatprep.subr.mxu0 0.0
    %1148 = vmatpush1.msra.mxu0 0.0
    %1149 = vmatprep.subr.mxu0 0.0
    %1150 = vmatpush1.msra.mxu0 0.0
    %1151 = vmatprep.subr.mxu0 0.0
    %1152 = vmatpush1.msra.mxu0 0.0
    %1153 = vmatprep.subr.mxu0 0.0
    %1154 = vmatpush1.msra.mxu0 0.0
    %1155 = vmatprep.subr.mxu0 0.0
    %1156 = vmatpush1.msra.mxu0 0.0
    %1157 = vmatprep.subr.mxu0 0.0
    %1158 = vmatpush1.msra.mxu0 0.0
    %1159 = vmatprep.subr.mxu0 0.0
    %1160 = vmatpush1.msra.mxu0 0.0
    %1161 = vmatprep.subr.mxu0 0.0
    %1162 = vmatpush1.msra.mxu0 0.0
    %1163 = vmatprep.subr.mxu0 0.0
    %1164 = vmatpush1.msra.mxu0 0.0
    %1165 = vmatprep.subr.mxu0 0.0
    %1166 = vmatpush1.msra.mxu0 0.0
    %1167 = vmatprep.subr.mxu0 0.0
    %1168 = vmatpush1.msra.mxu0 0.0
    %1169 = vmatprep.subr.mxu0 0.0
    %1170 = vmatpush1.msra.mxu0 0.0
    %1171 = vmatprep.subr.mxu0 0.0
    %1172 = vmatpush1.msra.mxu0 0.0
    %1173 = vmatprep.subr.mxu0 0.0
    %1174 = vmatpush1.msra.mxu0 0.0
    %1175 = vmatprep.subr.mxu0 0.0
    %1176 = vmatpush1.msra.mxu0 0.0
    %1177 = vmatprep.subr.mxu0 0.0
    %1178 = vmatpush1.msra.mxu0 0.0
    %1179 = vmatprep.subr.mxu0 0.0
    %1180 = vmatpush1.msra.mxu0 0.0
    %1181 = vmatprep.subr.mxu0 0.0
    %1182 = vmatpush1.msra.mxu0 0.0
    %1183 = vmatprep.subr.mxu0 0.0
    %1184 = vmatpush1.msra.mxu0 0.0
    %1185 = vmatprep.subr.mxu0 0.0
    %1186 = vmatpush1.msra.mxu0 0.0
    %1187 = vmatprep.subr.mxu0 0.0
    %1188 = vmatpush1.msra.mxu0 0.0
    %1189 = vmatprep.subr.mxu0 0.0
    %1190 = vmatpush1.msra.mxu0 0.0
    %1191 = vmatprep.subr.mxu0 0.0
    %1192 = vmatpush1.msra.mxu0 0.0
    %1193 = vmatprep.subr.mxu0 0.0
    %1194 = vmatpush1.msra.mxu0 0.0
    %1195 = vmatprep.subr.mxu0 0.0
    %1196 = vmatpush1.msra.mxu0 0.0
    %1197 = vmatprep.subr.mxu0 0.0
    %1198 = vmatpush1.msra.mxu0 0.0
    %1199 = vmatprep.subr.mxu0 0.0
    %1200 = vmatpush1.msra.mxu0 0.0
    %1201 = vmatprep.mubr.f32.mxu0 0.0
    %1202 = vmatmul.mubr.f32.gmra.mrb[0].mxu0 %v1135
    %v1203 = vpop.f32.mrb[0].mxu0
    %v1204 = vadd.f32 0.0, %v1203
    %v1205 = vpop.f32.mrb[0].mxu0
    %1206 = vdwg.mxu0
    %v1207 = vadd.f32 %v474, %v1204
    %v1208 = vxor.u32 %v1207, 2147483648
    %v1209 = vmul.f32 %v1208, 1.442695
    %v1210 = vpow.pop %v1209
    %v1211 = vadd.f32 %v1210, 1.0
    %v1212 = vrcp.pop %v1211
    %v1213 = vmul.f32 1.0, %v1212
    %v1214 = vtanh.pop %v1207
    %v1216 = vrot.slane %v1120, 4
    %v1218 = vmul.f32 %v1213, %v1216
    %1220 = vrot.lane.b32.xlu0 %v1214, 64
    %v1221 = vpop.permute.xlu0 %1220
    %v1223 = vmul.f32 %v1213, %v1221
    %1225 = vrot.lane.b32.xlu0 %v1223, 32
    %v1226 = vpop.permute.xlu0 %1225
    %v1228 = vadd.f32 %v1218, %v1226
    %v1229 = vtanh.pop %v1228
    %1231 = vrot.lane.b32.xlu0 %v1229, 64
    %v1232 = vpop.permute.xlu0 %1231
    %v1234 = vmul.f32 %v1213, %v1232
    %1236 = vrot.lane.b32.xlu0 %v1234, 32
    %v1237 = vpop.permute.xlu0 %1236
    %1239 = vst.msk [vmem:[#allocation2 + $0x18] sm:$0xf] %vm589, %v1237
    %v1240 = vsel %vm267, %v1237, 0
    %1242 = vmatprep.subr.mxu0 0.0
    %1243 = vmatpush1.msra.mxu0 %v477
    %1244 = vmatprep.subr.mxu0 0.0
    %1245 = vmatpush1.msra.mxu0 %v478
    %1246 = vmatprep.subr.mxu0 0.0
    %1247 = vmatpush1.msra.mxu0 %v479
    %1248 = vmatprep.subr.mxu0 0.0
    %1249 = vmatpush1.msra.mxu0 %v480
    %1250 = vmatprep.subr.mxu0 0.0
    %1251 = vmatpush1.msra.mxu0 0.0
    %1252 = vmatprep.subr.mxu0 0.0
    %1253 = vmatpush1.msra.mxu0 0.0
    %1254 = vmatprep.subr.mxu0 0.0
    %1255 = vmatpush1.msra.mxu0 0.0
    %1256 = vmatprep.subr.mxu0 0.0
    %1257 = vmatpush1.msra.mxu0 0.0
    %1258 = vmatprep.subr.mxu0 0.0
    %1259 = vmatpush1.msra.mxu0 0.0
    %1260 = vmatprep.subr.mxu0 0.0
    %1261 = vmatpush1.msra.mxu0 0.0
    %1262 = vmatprep.subr.mxu0 0.0
    %1263 = vmatpush1.msra.mxu0 0.0
    %1264 = vmatprep.subr.mxu0 0.0
    %1265 = vmatpush1.msra.mxu0 0.0
    %1266 = vmatprep.subr.mxu0 0.0
    %1267 = vmatpush1.msra.mxu0 0.0
    %1268 = vmatprep.subr.mxu0 0.0
    %1269 = vmatpush1.msra.mxu0 0.0
    %1270 = vmatprep.subr.mxu0 0.0
    %1271 = vmatpush1.msra.mxu0 0.0
    %1272 = vmatprep.subr.mxu0 0.0
    %1273 = vmatpush1.msra.mxu0 0.0
    %1274 = vmatprep.subr.mxu0 0.0
    %1275 = vmatpush1.msra.mxu0 0.0
    %1276 = vmatprep.subr.mxu0 0.0
    %1277 = vmatpush1.msra.mxu0 0.0
    %1278 = vmatprep.subr.mxu0 0.0
    %1279 = vmatpush1.msra.mxu0 0.0
    %1280 = vmatprep.subr.mxu0 0.0
    %1281 = vmatpush1.msra.mxu0 0.0
    %1282 = vmatprep.subr.mxu0 0.0
    %1283 = vmatpush1.msra.mxu0 0.0
    %1284 = vmatprep.subr.mxu0 0.0
    %1285 = vmatpush1.msra.mxu0 0.0
    %1286 = vmatprep.subr.mxu0 0.0
    %1287 = vmatpush1.msra.mxu0 0.0
    %1288 = vmatprep.subr.mxu0 0.0
    %1289 = vmatpush1.msra.mxu0 0.0
    %1290 = vmatprep.subr.mxu0 0.0
    %1291 = vmatpush1.msra.mxu0 0.0
    %1292 = vmatprep.subr.mxu0 0.0
    %1293 = vmatpush1.msra.mxu0 0.0
    %1294 = vmatprep.subr.mxu0 0.0
    %1295 = vmatpush1.msra.mxu0 0.0
    %1296 = vmatprep.subr.mxu0 0.0
    %1297 = vmatpush1.msra.mxu0 0.0
    %1298 = vmatprep.subr.mxu0 0.0
    %1299 = vmatpush1.msra.mxu0 0.0
    %1300 = vmatprep.subr.mxu0 0.0
    %1301 = vmatpush1.msra.mxu0 0.0
    %1302 = vmatprep.subr.mxu0 0.0
    %1303 = vmatpush1.msra.mxu0 0.0
    %1304 = vmatprep.subr.mxu0 0.0
    %1305 = vmatpush1.msra.mxu0 0.0
    %1306 = vmatprep.mubr.f32.mxu0 0.0
    %1307 = vmatmul.mubr.f32.gmra.mrb[0].mxu0 %v1240
    %v1308 = vpop.f32.mrb[0].mxu0
    %v1309 = vadd.f32 0.0, %v1308
    %v1310 = vpop.f32.mrb[0].mxu0
    %1311 = vdwg.mxu0
    %v1313 = vrot.slane %v1309, 4
    %v1315 = vadd.f32 %v474, %v1313
    %v1316 = vxor.u32 %v1315, 2147483648
    %v1317 = vmul.f32 %v1316, 1.442695
    %v1318 = vpow.pop %v1317
    %v1319 = vadd.f32 %v1318, 1.0
    %v1320 = vrcp.pop %v1319
    %v1321 = vmul.f32 1.0, %v1320
    %v1322 = vtanh.pop %v1315
    %v1324 = vrot.slane %v1228, 4
    %v1326 = vmul.f32 %v1321, %v1324
    %1328 = vrot.lane.b32.xlu0 %v1322, 64
    %v1329 = vpop.permute.xlu0 %1328
    %v1331 = vmul.f32 %v1321, %v1329
    %1333 = vrot.lane.b32.xlu0 %v1331, 32
    %v1334 = vpop.permute.xlu0 %1333
    %v1336 = vadd.f32 %v1326, %v1334
    %v1337 = vtanh.pop %v1336
    %1339 = vrot.lane.b32.xlu0 %v1337, 64
    %v1340 = vpop.permute.xlu0 %1339
    %v1342 = vmul.f32 %v1321, %v1340
    %1344 = vrot.lane.b32.xlu0 %v1342, 32
    %v1345 = vpop.permute.xlu0 %1344
    %1347 = vst.msk [vmem:[#allocation2 + $0x18] sm:$0xf0] %vm698, %v1345
    %1348 = vst.msk [vmem:[#allocation16 - $0x4] sm:$0xf0] %vm698, %v1345
    %1350 = vrot.lane.b32.xlu0 %v1336, 96
    %v1351 = vpop.permute.xlu0 %1350
    %1353 = vst.msk [vmem:[#allocation18 - $0x4] sm:$0xf0] %vm698, %v1351
    %v1354 = vld [vmem:[#allocation2] sm:$0xff]
    %v1355 = vld [vmem:[#allocation2 + $0x8] sm:$0xff]
    %v1356 = vld [vmem:[#allocation2 + $0x10] sm:$0xff]
    %v1357 = vld [vmem:[#allocation2 + $0x18] sm:$0xff]
    %v1358 = vmax.f32 %v1354, 0.0
    %v1359 = vmax.f32 %v1355, 0.0
    %v1360 = vmax.f32 %v1356, 0.0
    %v1361 = vmax.f32 %v1357, 0.0
    %v1362 = vld [vmem:[#allocation11] sm:$0xff]
    %v1363 = vld [vmem:[#allocation11 + $0x8] sm:$0xff]
    %v1364 = vld [vmem:[#allocation11 + $0x10] sm:$0xff]
    %v1365 = vld [vmem:[#allocation11 + $0x18] sm:$0xff]
    %v1366 = vld [vmem:[#allocation12] sm:$0x1]
    %v1368 = vlaneseq
    %v1369 = vshrl.u32 %v1368, 7
    %v1370 = vsub.s32 0, %v1369
    %v1371 = vrot.slane %v1366, %v1370
    %v1374 = vsel %vm267, %v1358, 0
    %v1377 = vsel %vm267, %v1359, 0
    %v1380 = vsel %vm267, %v1360, 0
    %v1383 = vsel %vm267, %v1361, 0
    %1385 = vmatprep.subr.mxu0 0.0
    %1386 = vmatpush1.msra.mxu0 %v1362
    %1387 = vmatprep.subr.mxu0 0.0
    %1388 = vmatpush1.msra.mxu0 %v1363
    %1389 = vmatprep.subr.mxu0 0.0
    %1390 = vmatpush1.msra.mxu0 %v1364
    %1391 = vmatprep.subr.mxu0 0.0
    %1392 = vmatpush1.msra.mxu0 %v1365
    %1393 = vmatprep.subr.mxu0 0.0
    %1394 = vmatpush1.msra.mxu0 0.0
    %1395 = vmatprep.subr.mxu0 0.0
    %1396 = vmatpush1.msra.mxu0 0.0
    %1397 = vmatprep.subr.mxu0 0.0
    %1398 = vmatpush1.msra.mxu0 0.0
    %1399 = vmatprep.subr.mxu0 0.0
    %1400 = vmatpush1.msra.mxu0 0.0
    %1401 = vmatprep.subr.mxu0 0.0
    %1402 = vmatpush1.msra.mxu0 0.0
    %1403 = vmatprep.subr.mxu0 0.0
    %1404 = vmatpush1.msra.mxu0 0.0
    %1405 = vmatprep.subr.mxu0 0.0
    %1406 = vmatpush1.msra.mxu0 0.0
    %1407 = vmatprep.subr.mxu0 0.0
    %1408 = vmatpush1.msra.mxu0 0.0
    %1409 = vmatprep.subr.mxu0 0.0
    %1410 = vmatpush1.msra.mxu0 0.0
    %1411 = vmatprep.subr.mxu0 0.0
    %1412 = vmatpush1.msra.mxu0 0.0
    %1413 = vmatprep.subr.mxu0 0.0
    %1414 = vmatpush1.msra.mxu0 0.0
    %1415 = vmatprep.subr.mxu0 0.0
    %1416 = vmatpush1.msra.mxu0 0.0
    %1417 = vmatprep.subr.mxu0 0.0
    %1418 = vmatpush1.msra.mxu0 0.0
    %1419 = vmatprep.subr.mxu0 0.0
    %1420 = vmatpush1.msra.mxu0 0.0
    %1421 = vmatprep.subr.mxu0 0.0
    %1422 = vmatpush1.msra.mxu0 0.0
    %1423 = vmatprep.subr.mxu0 0.0
    %1424 = vmatpush1.msra.mxu0 0.0
    %1425 = vmatprep.subr.mxu0 0.0
    %1426 = vmatpush1.msra.mxu0 0.0
    %1427 = vmatprep.subr.mxu0 0.0
    %1428 = vmatpush1.msra.mxu0 0.0
    %1429 = vmatprep.subr.mxu0 0.0
    %1430 = vmatpush1.msra.mxu0 0.0
    %1431 = vmatprep.subr.mxu0 0.0
    %1432 = vmatpush1.msra.mxu0 0.0
    %1433 = vmatprep.subr.mxu0 0.0
    %1434 = vmatpush1.msra.mxu0 0.0
    %1435 = vmatprep.subr.mxu0 0.0
    %1436 = vmatpush1.msra.mxu0 0.0
    %1437 = vmatprep.subr.mxu0 0.0
    %1438 = vmatpush1.msra.mxu0 0.0
    %1439 = vmatprep.subr.mxu0 0.0
    %1440 = vmatpush1.msra.mxu0 0.0
    %1441 = vmatprep.subr.mxu0 0.0
    %1442 = vmatpush1.msra.mxu0 0.0
    %1443 = vmatprep.subr.mxu0 0.0
    %1444 = vmatpush1.msra.mxu0 0.0
    %1445 = vmatprep.subr.mxu0 0.0
    %1446 = vmatpush1.msra.mxu0 0.0
    %1447 = vmatprep.subr.mxu0 0.0
    %1448 = vmatpush1.msra.mxu0 0.0
    %1449 = vmatprep.mubr.f32.mxu0 0.0
    %1450 = vmatmul.mubr.f32.gmra.mrb[0].mxu0 %v1374
    %v1451 = vpop.f32.mrb[0].mxu0
    %v1452 = vadd.f32 %v1371, %v1451
    %v1453 = vpop.f32.mrb[0].mxu0
    %1454 = vmatprep.mubr.f32.mxu0 0.0
    %1455 = vmatmul.mubr.f32.gmra.mrb[0].mxu0 %v1377
    %v1456 = vpop.f32.mrb[0].mxu0
    %v1457 = vadd.f32 %v1371, %v1456
    %v1458 = vpop.f32.mrb[0].mxu0
    %1459 = vmatprep.mubr.f32.mxu0 0.0
    %1460 = vmatmul.mubr.f32.gmra.mrb[0].mxu0 %v1380
    %v1461 = vpop.f32.mrb[0].mxu0
    %v1462 = vadd.f32 %v1371, %v1461
    %v1463 = vpop.f32.mrb[0].mxu0
    %1464 = vmatprep.mubr.f32.mxu0 0.0
    %1465 = vmatmul.mubr.f32.gmra.mrb[0].mxu0 %v1383
    %v1466 = vpop.f32.mrb[0].mxu0
    %v1467 = vadd.f32 %v1371, %v1466
    %v1468 = vpop.f32.mrb[0].mxu0
    %1469 = vdwg.mxu0
    %v1470 = vmax.f32 %v1452, 0.0
    %v1471 = vmax.f32 %v1457, 0.0
    %v1472 = vmax.f32 %v1462, 0.0
    %v1473 = vmax.f32 %v1467, 0.0
    %v1474 = vld [vmem:[%s12] sm:$0xff]
    %v1475 = vld [vmem:[%s12 + $0x8] sm:$0xff]
    %v1476 = vld [vmem:[%s12 + $0x10] sm:$0xff]
    %v1477 = vld [vmem:[%s12 + $0x18] sm:$0xff]
    %v1478 = vld [vmem:[#allocation14] sm:$0x1]
    %v1480 = vlaneseq
    %v1481 = vshrl.u32 %v1480, 7
    %v1482 = vsub.s32 0, %v1481
    %v1483 = vrot.slane %v1478, %v1482
    %v1486 = vsel %vm267, %v1470, 0
    %v1489 = vsel %vm267, %v1471, 0
    %v1492 = vsel %vm267, %v1472, 0
    %v1495 = vsel %vm267, %v1473, 0
    %1497 = vmatprep.subr.mxu0 0.0
    %1498 = vmatpush1.msra.mxu0 %v1474
    %1499 = vmatprep.subr.mxu0 0.0
    %1500 = vmatpush1.msra.mxu0 %v1475
    %1501 = vmatprep.subr.mxu0 0.0
    %1502 = vmatpush1.msra.mxu0 %v1476
    %1503 = vmatprep.subr.mxu0 0.0
    %1504 = vmatpush1.msra.mxu0 %v1477
    %1505 = vmatprep.subr.mxu0 0.0
    %1506 = vmatpush1.msra.mxu0 0.0
    %1507 = vmatprep.subr.mxu0 0.0
    %1508 = vmatpush1.msra.mxu0 0.0
    %1509 = vmatprep.subr.mxu0 0.0
    %1510 = vmatpush1.msra.mxu0 0.0
    %1511 = vmatprep.subr.mxu0 0.0
    %1512 = vmatpush1.msra.mxu0 0.0
    %1513 = vmatprep.subr.mxu0 0.0
    %1514 = vmatpush1.msra.mxu0 0.0
    %1515 = vmatprep.subr.mxu0 0.0
    %1516 = vmatpush1.msra.mxu0 0.0
    %1517 = vmatprep.subr.mxu0 0.0
    %1518 = vmatpush1.msra.mxu0 0.0
    %1519 = vmatprep.subr.mxu0 0.0
    %1520 = vmatpush1.msra.mxu0 0.0
    %1521 = vmatprep.subr.mxu0 0.0
    %1522 = vmatpush1.msra.mxu0 0.0
    %1523 = vmatprep.subr.mxu0 0.0
    %1524 = vmatpush1.msra.mxu0 0.0
    %1525 = vmatprep.subr.mxu0 0.0
    %1526 = vmatpush1.msra.mxu0 0.0
    %1527 = vmatprep.subr.mxu0 0.0
    %1528 = vmatpush1.msra.mxu0 0.0
    %1529 = vmatprep.subr.mxu0 0.0
    %1530 = vmatpush1.msra.mxu0 0.0
    %1531 = vmatprep.subr.mxu0 0.0
    %1532 = vmatpush1.msra.mxu0 0.0
    %1533 = vmatprep.subr.mxu0 0.0
    %1534 = vmatpush1.msra.mxu0 0.0
    %1535 = vmatprep.subr.mxu0 0.0
    %1536 = vmatpush1.msra.mxu0 0.0
    %1537 = vmatprep.subr.mxu0 0.0
    %1538 = vmatpush1.msra.mxu0 0.0
    %1539 = vmatprep.subr.mxu0 0.0
    %1540 = vmatpush1.msra.mxu0 0.0
    %1541 = vmatprep.subr.mxu0 0.0
    %1542 = vmatpush1.msra.mxu0 0.0
    %1543 = vmatprep.subr.mxu0 0.0
    %1544 = vmatpush1.msra.mxu0 0.0
    %1545 = vmatprep.subr.mxu0 0.0
    %1546 = vmatpush1.msra.mxu0 0.0
    %1547 = vmatprep.subr.mxu0 0.0
    %1548 = vmatpush1.msra.mxu0 0.0
    %1549 = vmatprep.subr.mxu0 0.0
    %1550 = vmatpush1.msra.mxu0 0.0
    %1551 = vmatprep.subr.mxu0 0.0
    %1552 = vmatpush1.msra.mxu0 0.0
    %1553 = vmatprep.subr.mxu0 0.0
    %1554 = vmatpush1.msra.mxu0 0.0
    %1555 = vmatprep.subr.mxu0 0.0
    %1556 = vmatpush1.msra.mxu0 0.0
    %1557 = vmatprep.subr.mxu0 0.0
    %1558 = vmatpush1.msra.mxu0 0.0
    %1559 = vmatprep.subr.mxu0 0.0
    %1560 = vmatpush1.msra.mxu0 0.0
    %1561 = vmatprep.mubr.f32.mxu0 0.0
    %1562 = vmatmul.mubr.f32.gmra.mrb[0].mxu0 %v1486
    %v1563 = vpop.f32.mrb[0].mxu0
    %v1564 = vadd.f32 %v1483, %v1563
    %v1565 = vpop.f32.mrb[0].mxu0
    %1566 = vmatprep.mubr.f32.mxu0 0.0
    %1567 = vmatmul.mubr.f32.gmra.mrb[0].mxu0 %v1489
    %v1568 = vpop.f32.mrb[0].mxu0
    %v1569 = vadd.f32 %v1483, %v1568
    %v1570 = vpop.f32.mrb[0].mxu0
    %1571 = vmatprep.mubr.f32.mxu0 0.0
    %1572 = vmatmul.mubr.f32.gmra.mrb[0].mxu0 %v1492
    %v1573 = vpop.f32.mrb[0].mxu0
    %v1574 = vadd.f32 %v1483, %v1573
    %v1575 = vpop.f32.mrb[0].mxu0
    %1576 = vmatprep.mubr.f32.mxu0 0.0
    %1577 = vmatmul.mubr.f32.gmra.mrb[0].mxu0 %v1495
    %v1578 = vpop.f32.mrb[0].mxu0
    %v1579 = vadd.f32 %v1483, %v1578
    %v1580 = vpop.f32.mrb[0].mxu0
    %1581 = vdwg.mxu0
    %vm1582 = vcmask 64512
    %v1583 = vsel %vm1582, %v1564, -inf
    %1584 = vmax.xlane.f32.xlu0 %v1583
    %v1585 = vpop.xlane.xlu0 %1584
    %v1586 = vsel %vm1582, %v1569, -inf
    %1587 = vmax.xlane.f32.xlu0 %v1586
    %v1588 = vpop.xlane.xlu0 %1587
    %v1589 = vsel %vm1582, %v1574, -inf
    %1590 = vmax.xlane.f32.xlu0 %v1589
    %v1591 = vpop.xlane.xlu0 %1590
    %v1592 = vsel %vm1582, %v1579, -inf
    %1593 = vmax.xlane.f32.xlu0 %v1592
    %v1594 = vpop.xlane.xlu0 %1593
    %v1595 = vsub.f32 %v1564, %v1585
    %v1596 = vsub.f32 %v1569, %v1588
    %v1597 = vsub.f32 %v1574, %v1591
    %v1598 = vsub.f32 %v1579, %v1594
    %v1599 = vmul.f32 %v1595, 1.442695
    %v1600 = vpow.pop %v1599
    %v1601 = vmul.f32 %v1596, 1.442695
    %v1602 = vpow.pop %v1601
    %v1603 = vmul.f32 %v1597, 1.442695
    %v1604 = vpow.pop %v1603
    %v1605 = vmul.f32 %v1598, 1.442695
    %v1606 = vpow.pop %v1605
    %v1607 = vsel %vm1582, %v1600, 0.0
    %1608 = vadd.xlane.f32.xlu0 %v1607
    %v1609 = vpop.xlane.xlu0 %1608
    %v1610 = vsel %vm1582, %v1602, 0.0
    %1611 = vadd.xlane.f32.xlu0 %v1610
    %v1612 = vpop.xlane.xlu0 %1611
    %v1613 = vsel %vm1582, %v1604, 0.0
    %1614 = vadd.xlane.f32.xlu0 %v1613
    %v1615 = vpop.xlane.xlu0 %1614
    %v1616 = vsel %vm1582, %v1606, 0.0
    %1617 = vadd.xlane.f32.xlu0 %v1616
    %v1618 = vpop.xlane.xlu0 %1617
    %v1619 = vlog2.pop %v1609
    %v1620 = vmul.f32 %v1619, 0.6931472
    %v1621 = vlog2.pop %v1612
    %v1622 = vmul.f32 %v1621, 0.6931472
    %v1623 = vlog2.pop %v1615
    %v1624 = vmul.f32 %v1623, 0.6931472
    %v1625 = vlog2.pop %v1618
    %v1626 = vmul.f32 %v1625, 0.6931472
    %v1627 = vadd.f32 %v1620, %v1585
    %v1628 = vadd.f32 %v1622, %v1588
    %v1629 = vadd.f32 %v1624, %v1591
    %v1630 = vadd.f32 %v1626, %v1594
    %v1631 = vsub.f32 %v1564, %v1627
    %v1632 = vsub.f32 %v1569, %v1628
    %v1633 = vsub.f32 %v1574, %v1629
    %v1634 = vsub.f32 %v1579, %v1630
    %1635 = vst.msk [vmem:[#allocation15] sm:$0xff] %vm1582, %v1631
    %1636 = vst.msk [vmem:[#allocation15 + $0x8] sm:$0xff] %vm1582, %v1632
    %1637 = vst.msk [vmem:[#allocation15 + $0x10] sm:$0xff] %vm1582, %v1633
    %1638 = vst.msk [vmem:[#allocation15 + $0x18] sm:$0xff] %vm1582, %v1634
    // Predicated region
    $region86: #{lstm_policy_forward.1} parent=1 // pred_check
      _
    $region87: #{lstm_policy_forward.1} parent=1 // pred_check_branch
      %1640 = sbr.rel (0) target = $region89
    $region88: #{lstm_policy_forward.1} parent=1 // pred_region
      %s1642 = ssub.s32 512, 512
      %1643 = vsyncadd [#allocation5], %s1642
      %s1644 = sshll.u32 [#allocation15], 4
      %s1645 = int_to_ptr.vmem [resolvable:$true] %s1644
      %1650 = dma.vmem_to_hbm [thread:$0]  %s1645, 512, %s14, [#allocation5], 128, 128, 8
    $region89: #{lstm_policy_forward.1} parent=1 // pred_fallthru
      _
    // Predicated region
    $region90: #{lstm_policy_forward.1} parent=1 // pred_check
      _
    $region91: #{lstm_policy_forward.1} parent=1 // pred_check_branch
      %1652 = sbr.rel (0) target = $region93
    $region92: #{lstm_policy_forward.1} parent=1 // pred_region
      %s1654 = ssub.s32 64, 64
      %1655 = vsyncadd [#allocation17], %s1654
      %s1657 = sshll.u32 [#allocation16], 4
      %s1658 = int_to_ptr.vmem [resolvable:$true] %s1657
      %1660 = dma.vmem_to_hbm [thread:$0]  %s1658, 64, %s15, [#allocation17]
    $region93: #{lstm_policy_forward.1} parent=1 // pred_fallthru
      _
    // Predicated region
    $region94: #{lstm_policy_forward.1} parent=1 // pred_check
      _
    $region95: #{lstm_policy_forward.1} parent=1 // pred_check_branch
      %1662 = sbr.rel (0) target = $region97
    $region96: #{lstm_policy_forward.1} parent=1 // pred_region
      %s1664 = ssub.s32 64, 64
      %1665 = vsyncadd [#allocation17], %s1664
      %s1667 = sshll.u32 [#allocation18], 4
      %s1668 = int_to_ptr.vmem [resolvable:$true] %s1667
      %1670 = dma.vmem_to_hbm [thread:$0]  %s1668, 64, %s16, [#allocation17]
    $region97: #{lstm_policy_forward.1} parent=1 // pred_fallthru
      _
    // Predicated region
    $region98: #{lstm_policy_forward.1} parent=1 // pred_check
      _
    $region99: #{lstm_policy_forward.1} parent=1 // pred_check_branch
      %1672 = sbr.rel (0) target = $region101
    $region100: #{lstm_policy_forward.1} parent=1 // pred_region
      %1673 = dma.done [#allocation5], 512
    $region101: #{lstm_policy_forward.1} parent=1 // pred_fallthru
      _
    // Predicated region
    $region102: #{lstm_policy_forward.1} parent=1 // pred_check
      _
    $region103: #{lstm_policy_forward.1} parent=1 // pred_check_branch
      %1675 = sbr.rel (0) target = $region105
    $region104: #{lstm_policy_forward.1} parent=1 // pred_region
      %1676 = dma.done [#allocation17], 64
    $region105: #{lstm_policy_forward.1} parent=1 // pred_fallthru
      _
    // Predicated region
    $region106: #{lstm_policy_forward.1} parent=1 // pred_check
      _
    $region107: #{lstm_policy_forward.1} parent=1 // pred_check_branch
      %1678 = sbr.rel (0) target = $region109
    $region108: #{lstm_policy_forward.1} parent=1 // pred_region
      %1679 = dma.done [#allocation17], 64
    $region109: #{lstm_policy_forward.1} parent=1 // pred_fallthru
      _
    %1680 = vsyncpa [#allocation4], 1
    %1681 = vsyncpa [#allocation7], 1
    %1682 = vsyncpa [#allocation10], 1
    %1683 = vsyncpa [#allocation13], 1
    %1684 = vsyncpa [#allocation5], 1
    %1685 = vsyncpa [#allocation17], 1

</llo_original>
